<compile_context>
chip_gen: v7x
topology: tpu7x:2x2x1
jax: 0.10.0
libtpu: 0.0.40
codegen_flags: <defaults>
</compile_context>

<pallas_src>
import jax
import jax.numpy as jnp
from jax import lax
from jax.experimental import pallas as pl
from jax.experimental.pallas import tpu as pltpu

ALPHA = 0.0          # CVDDNet initializes self.alpha = 0.0
COS_EPS = 1e-8       # torch.nn.CosineSimilarity default eps
LANE = 128
MIN_MXU_ROWS = 256   # row-fill target for the projection matmuls (v6e/v7x MXU)


def _make_cvdd_kernel(tanh_dtype):
    """Fused self-attention + cosine-distance kernel (tanh dtype static)."""

    def kernel(hidden_ref, w1_ref, w2_ref, c_ref, cnorm_ref,
               cos_dist_ref, att_ref):
        # hidden_ref : (tb, S, H)   bf16
        # w1_ref     : (H, Apad)    bf16   (pre-transposed, zero-padded W1^T)
        # w2_ref     : (Apad, K)    bf16   (pre-transposed, zero-padded W2^T)
        # c_ref      : (K, H)       f32    (context vectors, batch dim squeezed)
        # cnorm_ref  : (1, K)       f32    (||c|| precomputed in the wrapper)
        # cos_dist_ref : (tb, K)    f32
        # att_ref      : (tb, K, S) att_dtype (lane-dense: last dim = sequence)
        tb, S, H = hidden_ref.shape
        K = w2_ref.shape[1]

        hidden = hidden_ref[...]                          # (tb, S, H) bf16
        hidden_flat = hidden.reshape(tb * S, H)           # (N, H); S%8==0 -> free

        # x = tanh(hidden @ W1^T): one lane-dense (N, H) @ (H, Apad) MXU matmul
        # (plain contraction, weights already transposed — no in-kernel relayout).
        x32 = jnp.dot(hidden_flat, w1_ref[...],
                      preferred_element_type=jnp.float32)
        x = jnp.tanh(x32.astype(tanh_dtype)).astype(jnp.bfloat16)

        # logits = x @ W2^T : (N, Apad) @ (Apad, K), f32 accumulation.
        logits = jnp.dot(x, w2_ref[...], preferred_element_type=jnp.float32)
        # Re-laid out as (tb, K, S) so the softmax reduce is over the lane-dense
        # last axis and the A store matches the module's (B, K, S) layout.
        logits = jnp.swapaxes(logits.reshape(tb, S, K), 1, 2)   # (tb, K, S)

        # softmax over the sequence axis; EUP approx reciprocal.
        m = jnp.max(logits, axis=-1, keepdims=True)
        e = jnp.exp(logits - m)
        att = e * pl.reciprocal(jnp.sum(e, axis=-1, keepdims=True), approx=True)
        att_ref[...] = att.astype(att_ref.dtype)                # (tb, K, S)

        # M = A @ hidden  -> (tb, K, H)   (small batched matmul, f32 acc)
        M = lax.dot_general(att.astype(jnp.bfloat16), hidden,
                            (((2,), (1,)), ((0,), (0,))),
                            preferred_element_type=jnp.float32)

        # cosine similarity along hidden dim against c; ||c|| is constant
        # across the grid and arrives precomputed.  eps handling matches
        # torch.nn.CosineSimilarity: max(|M|*|c|, eps).
        c = c_ref[...]                                          # (K, H) f32
        num = jnp.sum(M * c[None, :, :], axis=-1)               # (tb, K)
        m_norm = jnp.sqrt(jnp.sum(M * M, axis=-1))              # (tb, K)
        denom = jnp.maximum(m_norm * cnorm_ref[...], COS_EPS)   # (1,K) bcast
        cos = num * pl.reciprocal(denom, approx=True)
        cos_dist_ref[...] = 0.5 * (1.0 - cos)                   # (tb, K)

    return kernel


def _vmem_budget_bytes():
    """~75% of this chip's per-TensorCore VMEM (capped at 100 MiB); falls back
    to a conservative 48 MiB (v7x-sized) budget if the query is unavailable."""
    try:
        cap = int(pltpu.get_tpu_info().vmem_capacity_bytes)
    except Exception:
        cap = 64 * 1024 * 1024
    return int(min(cap * 3 // 4, 100 * 1024 * 1024))


def _per_batch_row_vmem_bytes(S, H, Apad, K, att_bytes):
    """Rough per-batch-row VMEM cost (double-buffered streamed operands +
    single-buffered f32/bf16 intermediates)."""
    hid = 2 * S * H * 2                        # hidden bf16, double-buffered
    outs = 2 * K * S * att_bytes + 2 * K * 4   # A + cos_dist, double-buffered
    inter = S * Apad * (4 + 2)                 # x (f32 accumulator + bf16 copy)
    inter += 4 * K * S * 4                     # logits / exp / att (f32)
    inter += K * H * 4                         # M (f32)
    return hid + outs + inter


def _pick_batch_tile(B, S, rows_cap):
    """Pick the batch tile tb so that (a) tb divides B and tb % 8 == 0 (keeps
    the (tb, K) / (tb, K, S) output blocks (8,128)-tile aligned), (b) tb fits
    the VMEM budget, (c) tb*S >= MIN_MXU_ROWS when achievable (MXU row fill),
    and (d) at least 2 grid steps remain when possible so Pallas can overlap
    the hidden DMA with compute.  Falls back to the full batch for tiny/odd B
    (numerically fine; may cost VMEM for very large odd batches)."""
    cands = [t for t in range(8, B + 1, 8) if B % t == 0 and t <= rows_cap]
    if not cands:
        return B
    tier1 = [t for t in cands if t * S >= MIN_MXU_ROWS and B // t >= 2]
    if tier1:
        return max(tier1)          # big MXU tiles AND a pipelined grid
    tier2 = [t for t in cands if t * S >= MIN_MXU_ROWS]
    if tier2:
        return min(tier2)          # hit the row target even if grid collapses to 1
    tier3 = [t for t in cands if B // t >= 2]
    return max(tier3) if tier3 else max(cands)


def cvdd_forward(input_ids, attention_mask, params, *, alpha=ALPHA,
                 att_out_dtype=jnp.float32, tanh_dtype=jnp.bfloat16):
    """CVDDNet.forward -> (cosine_dist (B,K), context_weights (B,K), A (B,K,S)).

    attention_mask is accepted for API parity: in the PyTorch module it only
    feeds the frozen BERT encoder; the CVDD self-attention never masks its
    sequence softmax, and our embedding-lookup BERT stand-in ignores it too.
    Set tanh_dtype=jnp.float32 on v5e (no bf16 EUP); att_out_dtype=jnp.bfloat16
    halves the writeback bytes of the largest output.
    """
    del attention_mask
    emb = params['word_embeddings']                   # (V, H)
    w1 = params['W1']                                 # (A, H)  nn.Linear(H, A).weight
    w2 = params['W2']                                 # (K, A)  nn.Linear(A, K).weight
    c = params['c'][0].astype(jnp.float32)            # (1, K, H) -> (K, H)

    # --- "BERT" stand-in (glue, plain JAX): frozen embedding lookup, bf16 ---
    # TODO(synk): the full frozen BERT transformer encoder has no clean
    #             single-kernel Pallas equivalent here; an embedding lookup
    #             stands in for it (the BERT is frozen / eval-only in CVDDNet).
    #             Fusing this gather into the kernel (scalar-prefetch ids +
    #             row-gather DMA) only optimizes the stand-in, so it is kept
    #             as plain JAX.
    hidden = jnp.take(emb, input_ids, axis=0).astype(jnp.bfloat16)   # (B, S, H)

    B, S, H = hidden.shape
    K, A0 = w2.shape

    # Pre-transpose + zero-pad the resident weights once in the wrapper so both
    # projections are plain (lhs-last x rhs-first) contractions inside the
    # kernel.  The padding is an exact no-op: tanh(0)=0 and the matching rows
    # of W2^T are zero.
    Apad = ((A0 + LANE - 1) // LANE) * LANE
    w1t = jnp.pad(w1.T, ((0, 0), (0, Apad - A0))).astype(jnp.bfloat16)  # (H, Apad)
    w2t = jnp.pad(w2.T, ((0, Apad - A0), (0, 0))).astype(jnp.bfloat16)  # (Apad, K)
    c_norm = jnp.sqrt(jnp.sum(c * c, axis=-1))[None, :]                 # (1, K)

    # VMEM-budget-driven batch tile.
    budget = _vmem_budget_bytes()
    att_bytes = jnp.dtype(att_out_dtype).itemsize
    per_row = _per_batch_row_vmem_bytes(S, H, Apad, K, att_bytes)
    resident = 2 * ((H * Apad + Apad * K) * 2 + K * H * 4 + K * 4)
    rows_cap = max(8, ((budget - resident) // per_row) // 8 * 8)
    tb = _pick_batch_tile(B, S, rows_cap)
    grid = (B // tb,)

    kernel = _make_cvdd_kernel(tanh_dtype)

    cos_dist, A = pl.pallas_call(
        kernel,
        out_shape=(
            jax.ShapeDtypeStruct((B, K), jnp.float32),
            jax.ShapeDtypeStruct((B, K, S), att_out_dtype),
        ),
        grid=grid,
        in_specs=[
            pl.BlockSpec((tb, S, H), lambda i: (i, 0, 0)),    # hidden (streamed)
            pl.BlockSpec((H, Apad), lambda i: (0, 0)),        # W1^T (resident)
            pl.BlockSpec((Apad, K), lambda i: (0, 0)),        # W2^T (resident)
            pl.BlockSpec((K, H), lambda i: (0, 0)),           # c    (resident)
            pl.BlockSpec((1, K), lambda i: (0, 0)),           # ||c|| (resident)
        ],
        out_specs=(
            pl.BlockSpec((tb, K), lambda i: (i, 0)),
            pl.BlockSpec((tb, K, S), lambda i: (i, 0, 0)),
        ),
        compiler_params=pltpu.CompilerParams(
            dimension_semantics=("parallel",),       # megacore / v7x dual-TC
            vmem_limit_bytes=int(budget),            # matches the tile budget
        ),
    )(hidden, w1t, w2t, c, c_norm)

    # context_weights = softmax(-alpha * cosine_dist, dim=1): trivial K-wide op
    # done in plain JAX (drops a lane-sparse (tb, K) kernel output per step).
    if float(alpha) == 0.0:
        ctx_w = jnp.full((B, K), 1.0 / K, dtype=cos_dist.dtype)
    else:
        ctx_w = jax.nn.softmax(-alpha * cos_dist, axis=1)

    return cos_dist, ctx_w, A


def _reference_forward(input_ids, params, alpha=ALPHA):
    """Pure-JAX f32 reference mirroring the PyTorch module exactly."""
    emb = params['word_embeddings']
    w1, w2 = params['W1'], params['W2']
    c = params['c'][0]
    hidden = jnp.take(emb, input_ids, axis=0).astype(jnp.float32)
    x = jnp.tanh(jnp.einsum('bsh,ah->bsa', hidden, w1))
    logits = jnp.einsum('bsa,ka->bsk', x, w2)
    att = jax.nn.softmax(logits, axis=1)
    A = jnp.swapaxes(att, 1, 2)                               # (B, K, S)
    M = jnp.einsum('bks,bsh->bkh', A, hidden)                 # (B, K, H)
    num = jnp.sum(M * c[None], axis=-1)
    denom = jnp.maximum(jnp.linalg.norm(M, axis=-1)
                        * jnp.linalg.norm(c, axis=-1)[None], COS_EPS)
    cos_dist = 0.5 * (1.0 - num / denom)
    ctx_w = jax.nn.softmax(-alpha * cos_dist, axis=1)
    return cos_dist, ctx_w, A


if __name__ == "__main__":
    # Small but layout-friendly demo shapes (tile picker -> tb=16, grid=(2,)).
    B, S = 32, 16          # batch, sequence length
    H = 128                # hidden size (lane-friendly stand-in for BERT's 768)
    ATT = 100              # attention_size (module default; padded to 128)
    HEADS = 2              # attention_heads
    VOCAB = 64

    key = jax.random.PRNGKey(0)
    k_emb, k_w1, k_w2, k_c, k_ids = jax.random.split(key, 5)

    params = {
        'word_embeddings': jax.random.normal(k_emb, (VOCAB, H), jnp.float32) * 0.1,
        'W1': jax.random.normal(k_w1, (ATT, H), jnp.float32) * (1.0 / jnp.sqrt(H)),
        'W2': jax.random.normal(k_w2, (HEADS, ATT), jnp.float32) * (1.0 / jnp.sqrt(ATT)),
        # c = (rand(1, heads, hidden) - 0.5) * 2  -> uniform in [-1, 1)
        'c': jax.random.uniform(k_c, (1, HEADS, H), jnp.float32, minval=-1.0, maxval=1.0),
    }

    input_ids = jax.random.randint(k_ids, (B, S), 0, VOCAB, dtype=jnp.int32)
    attention_mask = jnp.ones((B, S), dtype=jnp.int32)

    cos_dist, ctx_w, A = cvdd_forward(input_ids, attention_mask, params)
    jax.block_until_ready((cos_dist, ctx_w, A))

    # Validate against the f32 pure-JAX reference (kernel uses bf16 matmul
    # inputs, bf16 tanh and EUP approx reciprocals -> looser tolerance).
    r_cd, r_cw, r_A = _reference_forward(input_ids, params)
    assert cos_dist.shape == r_cd.shape and ctx_w.shape == r_cw.shape and A.shape == r_A.shape
    assert jnp.allclose(cos_dist, r_cd, atol=2e-2), "cosine_dist mismatch"
    assert jnp.allclose(ctx_w, r_cw, atol=1e-6), "context_weights mismatch"
    assert jnp.allclose(A.astype(jnp.float32), r_A, atol=2e-2), "attention matrix mismatch"

    print("KERNEL_OK")
</pallas_src>

<mosaic_0001>
module attributes {stable_mosaic.version = 11 : i64} {
  func.func @kernel(%arg0: i32, %arg1: memref<16x16x128xbf16, #tpu.memory_space<vmem>>, %arg2: memref<128x128xbf16, #tpu.memory_space<vmem>>, %arg3: memref<128x2xbf16, #tpu.memory_space<vmem>>, %arg4: memref<2x128xf32, #tpu.memory_space<vmem>>, %arg5: memref<1x2xf32, #tpu.memory_space<vmem>>, %arg6: memref<16x2xf32, #tpu.memory_space<vmem>>, %arg7: memref<16x2x16xf32, #tpu.memory_space<vmem>>) attributes {dimension_semantics = [#tpu.dimension_semantics<parallel>], iteration_bounds = array<i64: 2>, scalar_prefetch = 0 : i64, scratch_operands = 0 : i64, tpu.core_type = #tpu.core_type<tc>, window_params = [{transform_indices = @transform_0, window_bounds = array<i64: 16, 16, 128>}, {pipeline_mode = #tpu.pipeline_mode<synchronous>, transform_indices = @transform_1, window_bounds = array<i64: 128, 128>}, {pipeline_mode = #tpu.pipeline_mode<synchronous>, transform_indices = @transform_2, window_bounds = array<i64: 128, 2>}, {pipeline_mode = #tpu.pipeline_mode<synchronous>, transform_indices = @transform_3, window_bounds = array<i64: 2, 128>}, {pipeline_mode = #tpu.pipeline_mode<synchronous>, transform_indices = @transform_4, window_bounds = array<i64: 1, 2>}, {transform_indices = @transform_5, window_bounds = array<i64: 16, 2>}, {transform_indices = @transform_6, window_bounds = array<i64: 16, 2, 16>}]} {
    %c0 = arith.constant 0 : index
    %c0_0 = arith.constant 0 : index
    %c0_1 = arith.constant 0 : index
    %0 = vector.load %arg1[%c0, %c0_0, %c0_1] : memref<16x16x128xbf16, #tpu.memory_space<vmem>>, vector<16x16x128xbf16>
    %1 = vector.shape_cast %0 : vector<16x16x128xbf16> to vector<256x128xbf16>
    %c0_2 = arith.constant 0 : index
    %c0_3 = arith.constant 0 : index
    %2 = vector.load %arg2[%c0_2, %c0_3] : memref<128x128xbf16, #tpu.memory_space<vmem>>, vector<128x128xbf16>
    %cst = arith.constant dense<0.000000e+00> : vector<256x128xf32>
    %3 = tpu.matmul %1, %2, %cst {dimension_numbers = #tpu.dot_dimension_numbers<[1], [0], [0], [1], [0, 0, 1, 1], [], []>} : vector<256x128xbf16>, vector<128x128xbf16>, vector<256x128xf32> -> vector<256x128xf32>
    %4 = arith.truncf %3 : vector<256x128xf32> to vector<256x128xbf16>
    %5 = math.tanh %4 : vector<256x128xbf16>
    %c0_4 = arith.constant 0 : index
    %c0_5 = arith.constant 0 : index
    %6 = vector.load %arg3[%c0_4, %c0_5] : memref<128x2xbf16, #tpu.memory_space<vmem>>, vector<128x2xbf16>
    %cst_6 = arith.constant dense<0.000000e+00> : vector<256x2xf32>
    %7 = tpu.matmul %5, %6, %cst_6 {dimension_numbers = #tpu.dot_dimension_numbers<[1], [0], [0], [1], [0, 0, 1, 1], [], []>} : vector<256x128xbf16>, vector<128x2xbf16>, vector<256x2xf32> -> vector<256x2xf32>
    %8 = vector.shape_cast %7 : vector<256x2xf32> to vector<16x16x2xf32>
    %9 = tpu.transpose %8, [0, 2, 1] : vector<16x16x2xf32> -> vector<16x2x16xf32>
    %cst_7 = arith.constant dense<0xFF800000> : vector<16x2xf32>
    %10 = vector.multi_reduction <maximumf>, %9, %cst_7 [2] : vector<16x2x16xf32> to vector<16x2xf32>
    %11 = vector.shape_cast %10 : vector<16x2xf32> to vector<16x2x1xf32>
    %12 = vector.broadcast %11 : vector<16x2x1xf32> to vector<16x2x16xf32>
    %13 = arith.subf %9, %12 : vector<16x2x16xf32>
    %14 = math.exp %13 : vector<16x2x16xf32>
    %cst_8 = arith.constant dense<0.000000e+00> : vector<16x2xf32>
    %15 = vector.multi_reduction <add>, %14, %cst_8 [2] : vector<16x2x16xf32> to vector<16x2xf32>
    %16 = vector.shape_cast %15 : vector<16x2xf32> to vector<16x2x1xf32>
    %17 = tpu.reciprocal %16 {approx = true} : vector<16x2x1xf32> -> vector<16x2x1xf32>
    %18 = vector.broadcast %17 : vector<16x2x1xf32> to vector<16x2x16xf32>
    %19 = arith.mulf %14, %18 : vector<16x2x16xf32>
    %c0_9 = arith.constant 0 : index
    %c0_10 = arith.constant 0 : index
    %c0_11 = arith.constant 0 : index
    %20 = vector.load %arg7[%c0_9, %c0_10, %c0_11] : memref<16x2x16xf32, #tpu.memory_space<vmem>>, vector<16x2x16xf32>
    tpu.vector_store %arg7[%c0_9, %c0_10, %c0_11], %19 {strides = array<i32>} : memref<16x2x16xf32, #tpu.memory_space<vmem>>, vector<16x2x16xf32>,
    %21 = arith.truncf %19 : vector<16x2x16xf32> to vector<16x2x16xbf16>
    %cst_12 = arith.constant dense<0.000000e+00> : vector<16x2x128xf32>
    %22 = tpu.matmul %21, %0, %cst_12 {dimension_numbers = #tpu.dot_dimension_numbers<[2], [1], [1], [2], [0, 0, 0, 1, 1, 2], [0], [0]>} : vector<16x2x16xbf16>, vector<16x16x128xbf16>, vector<16x2x128xf32> -> vector<16x2x128xf32>
    %c0_13 = arith.constant 0 : index
    %c0_14 = arith.constant 0 : index
    %23 = vector.load %arg4[%c0_13, %c0_14] : memref<2x128xf32, #tpu.memory_space<vmem>>, vector<2x128xf32>
    %24 = vector.shape_cast %23 : vector<2x128xf32> to vector<1x2x128xf32>
    %25 = vector.broadcast %24 : vector<1x2x128xf32> to vector<16x2x128xf32>
    %26 = arith.mulf %22, %25 : vector<16x2x128xf32>
    %cst_15 = arith.constant dense<0.000000e+00> : vector<16x2xf32>
    %27 = vector.multi_reduction <add>, %26, %cst_15 [2] : vector<16x2x128xf32> to vector<16x2xf32>
    %28 = arith.mulf %22, %22 : vector<16x2x128xf32>
    %cst_16 = arith.constant dense<0.000000e+00> : vector<16x2xf32>
    %29 = vector.multi_reduction <add>, %28, %cst_16 [2] : vector<16x2x128xf32> to vector<16x2xf32>
    %30 = math.sqrt %29 : vector<16x2xf32>
    %c0_17 = arith.constant 0 : index
    %c0_18 = arith.constant 0 : index
    %31 = vector.load %arg5[%c0_17, %c0_18] : memref<1x2xf32, #tpu.memory_space<vmem>>, vector<1x2xf32>
    %32 = vector.broadcast %31 : vector<1x2xf32> to vector<16x2xf32>
    %33 = arith.mulf %30, %32 : vector<16x2xf32>
    %cst_19 = arith.constant 9.99999993E-9 : f32
    %34 = vector.broadcast %cst_19 : f32 to vector<16x2xf32>
    %35 = arith.maximumf %33, %34 : vector<16x2xf32>
    %36 = tpu.reciprocal %35 {approx = true} : vector<16x2xf32> -> vector<16x2xf32>
    %37 = arith.mulf %27, %36 : vector<16x2xf32>
    %cst_20 = arith.constant 1.000000e+00 : f32
    %38 = vector.broadcast %cst_20 : f32 to vector<16x2xf32>
    %39 = arith.subf %38, %37 : vector<16x2xf32>
    %cst_21 = arith.constant 5.000000e-01 : f32
    %40 = vector.broadcast %cst_21 : f32 to vector<16x2xf32>
    %41 = arith.mulf %40, %39 : vector<16x2xf32>
    %c0_22 = arith.constant 0 : index
    %c0_23 = arith.constant 0 : index
    %42 = vector.load %arg6[%c0_22, %c0_23] : memref<16x2xf32, #tpu.memory_space<vmem>>, vector<16x2xf32>
    tpu.vector_store %arg6[%c0_22, %c0_23], %41 {strides = array<i32>} : memref<16x2xf32, #tpu.memory_space<vmem>>, vector<16x2xf32>,
    return
  }
  func.func @transform_0(%arg0: i32) -> (i32, i32, i32) {
    %c0_i32 = arith.constant 0 : i32
    %c0_i32_0 = arith.constant 0 : i32
    %c0_i32_1 = arith.constant 0 : i32
    return %arg0, %c0_i32, %c0_i32_0 : i32, i32, i32
  }
  func.func @transform_1(%arg0: i32) -> (i32, i32) {
    %c0_i32 = arith.constant 0 : i32
    %c0_i32_0 = arith.constant 0 : i32
    %c0_i32_1 = arith.constant 0 : i32
    return %c0_i32, %c0_i32_0 : i32, i32
  }
  func.func @transform_2(%arg0: i32) -> (i32, i32) {
    %c0_i32 = arith.constant 0 : i32
    %c0_i32_0 = arith.constant 0 : i32
    %c0_i32_1 = arith.constant 0 : i32
    return %c0_i32, %c0_i32_0 : i32, i32
  }
  func.func @transform_3(%arg0: i32) -> (i32, i32) {
    %c0_i32 = arith.constant 0 : i32
    %c0_i32_0 = arith.constant 0 : i32
    %c0_i32_1 = arith.constant 0 : i32
    return %c0_i32, %c0_i32_0 : i32, i32
  }
  func.func @transform_4(%arg0: i32) -> (i32, i32) {
    %c0_i32 = arith.constant 0 : i32
    %c0_i32_0 = arith.constant 0 : i32
    %c0_i32_1 = arith.constant 0 : i32
    return %c0_i32, %c0_i32_0 : i32, i32
  }
  func.func @transform_5(%arg0: i32) -> (i32, i32) {
    %c0_i32 = arith.constant 0 : i32
    %c0_i32_0 = arith.constant 0 : i32
    return %arg0, %c0_i32 : i32, i32
  }
  func.func @transform_6(%arg0: i32) -> (i32, i32, i32) {
    %c0_i32 = arith.constant 0 : i32
    %c0_i32_0 = arith.constant 0 : i32
    %c0_i32_1 = arith.constant 0 : i32
    return %arg0, %c0_i32, %c0_i32_0 : i32, i32, i32
  }
}

</mosaic_0001>

<llo_original>
// kernel: tpu_custom_call.1
$region0: #{tpu_custom_call.1}
  #allocation0 [shape = 'u32[]', space=smem, size = 0x4, offset = 0x4, fixed_abs, tag = 'smem constant byte address 0x4 - core index']
  #allocation1 [shape = 'u32[144,128]{1,0:T(1,128)}', space=vmem, size = 0x12000, scoped, tag = 'internal scratch']
  %s0 = inlined_call_operand.hbm [shape: bf16[32,16,128], index: 0, kind: input, shape index: {}]
  %s1 = inlined_call_operand.vmem [shape: bf16[128,128], index: 1, kind: input, shape index: {}]
  %s2 = inlined_call_operand.vmem [shape: bf16[128,2], index: 2, kind: input, shape index: {}]
  %s3 = inlined_call_operand.vmem [shape: f32[2,128], index: 3, kind: input, shape index: {}]
  %s4 = inlined_call_operand.vmem [shape: f32[1,2], index: 4, kind: input, shape index: {}]
  %s5 = inlined_call_operand.vmem [shape: f32[32,2], index: 5, kind: output, shape index: {0}]
  %s6 = inlined_call_operand.vmem [shape: f32[32,2,16], index: 6, kind: output, shape index: {1}]
  %7 = xla_tuple %s5, %s6
  %s8 = sld [smem:[#allocation0]]
  $region65: #{tpu_custom_call.1} parent=0
    _
  %s10 = ssub.s32 1, %s8
  %s11 = scalar_select 0, %s10, %s8
  $region1: #{tpu_custom_call.1} parent=0
    #allocation2 [shape = 'u8[131072]{0}', space=vmem, size = 0x20000, scoped, tag = 'input window, operand 0']
    #allocation3 [shape = 's32[2]{0}', space=sflag, size = 0x8, scoped, tag = 'scoped memory for tpu_custom_call.1']
    %12 = vsyncpa [#allocation3], 0
    %s13 = scalar_lea.sflag [#allocation3], 1
    %14 = vsyncpa %s13, 0
    loop: start=0, step=1, limit=4
    $region2: #{tpu_custom_call.1} parent=1 // loop_pre_header
      _
    $region3: #{tpu_custom_call.1} parent=1 // loop_header
      %s16 = sphi 0, %s20
      %p17 = scmp.ge.s32.totalorder %s16, 4
      %s26 = sphi 0, %s28
      %s29 = sphi 0, %s26
      %s30 = sphi 0, %s29
      %s46 = sphi 0, %s30
      %s50 = sphi 0, %s50
      %s52 = sphi 0, %s50
      %s53 = sphi 0, %s52
      %s67 = sphi 0, %s53
      %s71 = sphi 0, %s71
      %s73 = sphi 0, %s71
      %s74 = sphi 0, %s73
      %s88 = sphi 0, %s74
      %s92 = sphi 0, %s92
      %s94 = sphi 0, %s92
      %s95 = sphi 0, %s94
      %s109 = sphi 0, %s95
      %s113 = sphi 0, %s113
      %s115 = sphi 0, %s113
      %s116 = sphi 0, %s115
      %s130 = sphi 0, %s116
      %s136 = sphi 0, %s138
      %s139 = sphi 0, %s136
      %s140 = sphi 0, %s139
      %s156 = sphi 0, %s140
      %s162 = sphi 0, %s164
      %s165 = sphi 0, %s162
      %s166 = sphi 0, %s165
      %s182 = sphi 0, %s166
    $region4: #{tpu_custom_call.1} parent=1 // loop_header_branch
      %19 = sbr.rel (%p17) target = $region8
    $region5: #{tpu_custom_call.1} parent=1 // loop_body
      %s21 = ssub.s32 %s16, 1
      %s22 = ssub.s32 %s16, 2
      %s23 = sadd.s32 %s16, 1
      %s24 = ssub.s32 %s16, %s23
      %p25 = scmp.eq.s32.totalorder %s24, 0
      %s27 = sadd.s32 %s26, 1
      %s28 = scalar_select %p25, %s26, %s27
      %p31 = pneg %p25
      %p32 = scmp.eq.s32.totalorder %s16, 1
      %p33 = por %p31, %p32
      %p34 = scmp.ne.s32.totalorder %s26, %s29
      %p35 = scmp.eq.s32.totalorder %s16, 0
      %p36 = por %p34, %p35
      %p37 = scmp.ne.s32.totalorder %s26, %s29
      %p38 = scmp.eq.s32.totalorder %s21, 1
      %p39 = por %p37, %p38
      %p40 = scmp.ne.s32.totalorder %s29, %s30
      %p41 = scmp.eq.s32.totalorder %s21, 0
      %p42 = por %p40, %p41
      %p43 = scmp.ne.s32.totalorder %s29, %s30
      %p44 = scmp.eq.s32.totalorder %s22, 1
      %p45 = por %p43, %p44
      %p47 = scmp.ne.s32.totalorder %s30, %s46
      %p48 = scmp.eq.s32.totalorder %s22, 0
      %p49 = por %p47, %p48
      %s51 = sadd.s32 %s50, 1
      %p54 = scmp.eq.s32.totalorder %s16, 1
      %p55 = scmp.ne.s32.totalorder %s50, %s52
      %p56 = scmp.eq.s32.totalorder %s16, 0
      %p57 = por %p55, %p56
      %p58 = scmp.ne.s32.totalorder %s50, %s52
      %p59 = scmp.eq.s32.totalorder %s21, 1
      %p60 = por %p58, %p59
      %p61 = scmp.ne.s32.totalorder %s52, %s53
      %p62 = scmp.eq.s32.totalorder %s21, 0
      %p63 = por %p61, %p62
      %p64 = scmp.ne.s32.totalorder %s52, %s53
      %p65 = scmp.eq.s32.totalorder %s22, 1
      %p66 = por %p64, %p65
      %p68 = scmp.ne.s32.totalorder %s53, %s67
      %p69 = scmp.eq.s32.totalorder %s22, 0
      %p70 = por %p68, %p69
      %s72 = sadd.s32 %s71, 1
      %p75 = scmp.eq.s32.totalorder %s16, 1
      %p76 = scmp.ne.s32.totalorder %s71, %s73
      %p77 = scmp.eq.s32.totalorder %s16, 0
      %p78 = por %p76, %p77
      %p79 = scmp.ne.s32.totalorder %s71, %s73
      %p80 = scmp.eq.s32.totalorder %s21, 1
      %p81 = por %p79, %p80
      %p82 = scmp.ne.s32.totalorder %s73, %s74
      %p83 = scmp.eq.s32.totalorder %s21, 0
      %p84 = por %p82, %p83
      %p85 = scmp.ne.s32.totalorder %s73, %s74
      %p86 = scmp.eq.s32.totalorder %s22, 1
      %p87 = por %p85, %p86
      %p89 = scmp.ne.s32.totalorder %s74, %s88
      %p90 = scmp.eq.s32.totalorder %s22, 0
      %p91 = por %p89, %p90
      %s93 = sadd.s32 %s92, 1
      %p96 = scmp.eq.s32.totalorder %s16, 1
      %p97 = scmp.ne.s32.totalorder %s92, %s94
      %p98 = scmp.eq.s32.totalorder %s16, 0
      %p99 = por %p97, %p98
      %p100 = scmp.ne.s32.totalorder %s92, %s94
      %p101 = scmp.eq.s32.totalorder %s21, 1
      %p102 = por %p100, %p101
      %p103 = scmp.ne.s32.totalorder %s94, %s95
      %p104 = scmp.eq.s32.totalorder %s21, 0
      %p105 = por %p103, %p104
      %p106 = scmp.ne.s32.totalorder %s94, %s95
      %p107 = scmp.eq.s32.totalorder %s22, 1
      %p108 = por %p106, %p107
      %p110 = scmp.ne.s32.totalorder %s95, %s109
      %p111 = scmp.eq.s32.totalorder %s22, 0
      %p112 = por %p110, %p111
      %s114 = sadd.s32 %s113, 1
      %p117 = scmp.eq.s32.totalorder %s16, 1
      %p118 = scmp.ne.s32.totalorder %s113, %s115
      %p119 = scmp.eq.s32.totalorder %s16, 0
      %p120 = por %p118, %p119
      %p121 = scmp.ne.s32.totalorder %s113, %s115
      %p122 = scmp.eq.s32.totalorder %s21, 1
      %p123 = por %p121, %p122
      %p124 = scmp.ne.s32.totalorder %s115, %s116
      %p125 = scmp.eq.s32.totalorder %s21, 0
      %p126 = por %p124, %p125
      %p127 = scmp.ne.s32.totalorder %s115, %s116
      %p128 = scmp.eq.s32.totalorder %s22, 1
      %p129 = por %p127, %p128
      %p131 = scmp.ne.s32.totalorder %s116, %s130
      %p132 = scmp.eq.s32.totalorder %s22, 0
      %p133 = por %p131, %p132
      %s134 = ssub.s32 %s16, %s23
      %p135 = scmp.eq.s32.totalorder %s134, 0
      %s137 = sadd.s32 %s136, 1
      %s138 = scalar_select %p135, %s136, %s137
      %p141 = pneg %p135
      %p142 = scmp.eq.s32.totalorder %s16, 1
      %p143 = por %p141, %p142
      %p144 = scmp.ne.s32.totalorder %s136, %s139
      %p145 = scmp.eq.s32.totalorder %s16, 0
      %p146 = por %p144, %p145
      %p147 = scmp.ne.s32.totalorder %s136, %s139
      %p148 = scmp.eq.s32.totalorder %s21, 1
      %p149 = por %p147, %p148
      %p150 = scmp.ne.s32.totalorder %s139, %s140
      %p151 = scmp.eq.s32.totalorder %s21, 0
      %p152 = por %p150, %p151
      %p153 = scmp.ne.s32.totalorder %s139, %s140
      %p154 = scmp.eq.s32.totalorder %s22, 1
      %p155 = por %p153, %p154
      %p157 = scmp.ne.s32.totalorder %s140, %s156
      %p158 = scmp.eq.s32.totalorder %s22, 0
      %p159 = por %p157, %p158
      %s160 = ssub.s32 %s16, %s23
      %p161 = scmp.eq.s32.totalorder %s160, 0
      %s163 = sadd.s32 %s162, 1
      %s164 = scalar_select %p161, %s162, %s163
      %p167 = pneg %p161
      %p168 = scmp.eq.s32.totalorder %s16, 1
      %p169 = por %p167, %p168
      %p170 = scmp.ne.s32.totalorder %s162, %s165
      %p171 = scmp.eq.s32.totalorder %s16, 0
      %p172 = por %p170, %p171
      %p173 = scmp.ne.s32.totalorder %s162, %s165
      %p174 = scmp.eq.s32.totalorder %s21, 1
      %p175 = por %p173, %p174
      %p176 = scmp.ne.s32.totalorder %s165, %s166
      %p177 = scmp.eq.s32.totalorder %s21, 0
      %p178 = por %p176, %p177
      %p179 = scmp.ne.s32.totalorder %s165, %s166
      %p180 = scmp.eq.s32.totalorder %s22, 1
      %p181 = por %p179, %p180
      %p183 = scmp.ne.s32.totalorder %s166, %s182
      %p184 = scmp.eq.s32.totalorder %s22, 0
      %p185 = por %p183, %p184
      %p186 = scmp.le.s32.totalorder 1, %s16
      %p187 = scmp.lt.s32.totalorder %s16, 3
      %p188 = pnand %p186, %p187
      %p189 = pneg %p188
      // Predicated region
      $region9: #{tpu_custom_call.1} parent=5 // pred_check
        _
      $region10: #{tpu_custom_call.1} parent=5 // pred_check_branch
        %191 = sbr.rel (%p188) target = $region12
      $region11: #{tpu_custom_call.1} parent=5 // pred_region
        %s192 = ssub.s32 %s16, 1
        // Predicated region
        $region13: #{tpu_custom_call.1} parent=11 // pred_check
          %p193 = pneg %p63
        $region14: #{tpu_custom_call.1} parent=11 // pred_check_branch
          %195 = sbr.rel (%p193) target = $region16
        $region15: #{tpu_custom_call.1} parent=11 // pred_region
          _
        $region16: #{tpu_custom_call.1} parent=11 // pred_fallthru
          _
        // Predicated region
        $region17: #{tpu_custom_call.1} parent=11 // pred_check
          %p196 = pneg %p84
        $region18: #{tpu_custom_call.1} parent=11 // pred_check_branch
          %198 = sbr.rel (%p196) target = $region20
        $region19: #{tpu_custom_call.1} parent=11 // pred_region
          _
        $region20: #{tpu_custom_call.1} parent=11 // pred_fallthru
          _
        // Predicated region
        $region21: #{tpu_custom_call.1} parent=11 // pred_check
          %p199 = pneg %p105
        $region22: #{tpu_custom_call.1} parent=11 // pred_check_branch
          %201 = sbr.rel (%p199) target = $region24
        $region23: #{tpu_custom_call.1} parent=11 // pred_region
          _
        $region24: #{tpu_custom_call.1} parent=11 // pred_fallthru
          _
        // Predicated region
        $region25: #{tpu_custom_call.1} parent=11 // pred_check
          %p202 = pneg %p126
        $region26: #{tpu_custom_call.1} parent=11 // pred_check_branch
          %204 = sbr.rel (%p202) target = $region28
        $region27: #{tpu_custom_call.1} parent=11 // pred_region
          _
        $region28: #{tpu_custom_call.1} parent=11 // pred_fallthru
          _
      $region12: #{tpu_custom_call.1} parent=5 // pred_fallthru
        _
      %p205 = scmp.lt.s32.totalorder %s16, 2
      // Predicated region
      $region29: #{tpu_custom_call.1} parent=5 // pred_check
        %p206 = pneg %p205
      $region30: #{tpu_custom_call.1} parent=5 // pred_check_branch
        %208 = sbr.rel (%p206) target = $region32
      $region31: #{tpu_custom_call.1} parent=5 // pred_region
        // Predicated region
        $region33: #{tpu_custom_call.1} parent=31 // pred_check
          %p209 = pneg %p36
        $region34: #{tpu_custom_call.1} parent=31 // pred_check_branch
          %211 = sbr.rel (%p209) target = $region36
        $region35: #{tpu_custom_call.1} parent=31 // pred_region
          %s212 = sand.u32 %s26, 1
          %s213 = scalar_lea.sflag [#allocation3], %s212
          %s214 = sand.u32 %s26, 1
          %s215 = smul.addr %s214, 128
          %s216 = scalar_lea.vmem [#allocation2], %s215
          %s217 = smul.u32 16, %s16
          %s219 = ssub.s32 2048, 2048
          %220 = vsyncadd %s213, %s219
          %s221 = smul.addr %s217, 2
          %s222 = smul.addr %s221, 64
          %s223 = scalar_lea.hbm %s0, %s222
          %s224 = sshll.u32 %s216, 4
          %s225 = int_to_ptr.vmem [resolvable:$true] %s224
          %230 = dma.hbm_to_vmem [thread:$0]  %s223, 2048, %s225, %s213, 64, 64, 4
        $region36: #{tpu_custom_call.1} parent=31 // pred_fallthru
          _
      $region32: #{tpu_custom_call.1} parent=5 // pred_fallthru
        _
      %p231 = scmp.le.s32.totalorder 1, %s16
      %p232 = scmp.lt.s32.totalorder %s16, 3
      %p233 = pnand %p231, %p232
      %p234 = pneg %p233
      // Predicated region
      $region37: #{tpu_custom_call.1} parent=5 // pred_check
        _
      $region38: #{tpu_custom_call.1} parent=5 // pred_check_branch
        %236 = sbr.rel (%p233) target = $region40
      $region39: #{tpu_custom_call.1} parent=5 // pred_region
        %s237 = ssub.s32 %s16, 1
        %s238 = sand.u32 %s29, 1
        %s239 = scalar_lea.sflag [#allocation3], %s238
        %s240 = sand.u32 %s29, 1
        %s241 = smul.addr %s240, 128
        %s242 = scalar_lea.vmem [#allocation2], %s241
        // Predicated region
        $region41: #{tpu_custom_call.1} parent=39 // pred_check
          %p243 = pneg %p42
        $region42: #{tpu_custom_call.1} parent=39 // pred_check_branch
          %245 = sbr.rel (%p243) target = $region44
        $region43: #{tpu_custom_call.1} parent=39 // pred_region
          %246 = dma.done %s239, 2048
        $region44: #{tpu_custom_call.1} parent=39 // pred_fallthru
          _
        %s247 = sand.u32 %s29, 1
        %s248 = scalar_lea.sflag [#allocation3], %s247
        %s249 = sand.u32 %s29, 1
        %s250 = smul.addr %s249, 128
        %s251 = scalar_lea.vmem [#allocation2], %s250
        %p252 = pneg %p42
        %p253 = pneg %p39
        %p254 = pneg %p63
        %p255 = pneg %p60
        %p256 = pneg %p84
        %p257 = pneg %p81
        %p258 = pneg %p105
        %p259 = pneg %p102
        %p260 = pneg %p126
        %p261 = pneg %p123
        %p262 = pneg %p152
        %p263 = pneg %p149
        %s264 = smul.u32 2, %s21
        %p265 = scmp.lt.s32.totalorder %s264, 3
        %s266 = scalar_select %p265, %s264, 3
        %s267 = smul.addr %s266, 8
        %s268 = scalar_lea.vmem %s5, %s267
        %p269 = pneg %p178
        %p270 = pneg %p175
        %s271 = smul.u32 16, %s21
        %p272 = scmp.lt.s32.totalorder %s271, 31
        %s273 = scalar_select %p272, %s271, 31
        %s274 = smul.addr %s273, 2
        %s275 = scalar_lea.vmem %s6, %s274
        %s276 = smul.u32 16, %s21
        %s277 = smul.u32 2, %s21
        %p278 = scmp.lt.s32.totalorder %s277, 3
        %s279 = scalar_select %p278, %s277, 3
        %s280 = smul.addr %s279, 8
        %s281 = scalar_lea.vmem %s5, %s280
        %s282 = smul.u32 2, %s21
        %s283 = smul.u32 16, %s21
        %p284 = scmp.lt.s32.totalorder %s283, 31
        %s285 = scalar_select %p284, %s283, 31
        %s286 = smul.addr %s285, 2
        %s287 = scalar_lea.vmem %s6, %s286
        %s288 = smul.u32 16, %s21
        %v290 = vld [vmem:[%s242] sm:$0xf]
        %v291 = vld [vmem:[%s242 + $0x4] sm:$0xf]
        %v292 = vld [vmem:[%s242 + $0x8] sm:$0xf]
        %v293 = vld [vmem:[%s242 + $0xc] sm:$0xf]
        %v294 = vld [vmem:[%s242 + $0x10] sm:$0xf]
        %v295 = vld [vmem:[%s242 + $0x14] sm:$0xf]
        %v296 = vld [vmem:[%s242 + $0x18] sm:$0xf]
        %v297 = vld [vmem:[%s242 + $0x1c] sm:$0xf]
        %v298 = vld [vmem:[%s242 + $0x20] sm:$0xf]
        %v299 = vld [vmem:[%s242 + $0x24] sm:$0xf]
        %v300 = vld [vmem:[%s242 + $0x28] sm:$0xf]
        %v301 = vld [vmem:[%s242 + $0x2c] sm:$0xf]
        %v302 = vld [vmem:[%s242 + $0x30] sm:$0xf]
        %v303 = vld [vmem:[%s242 + $0x34] sm:$0xf]
        %v304 = vld [vmem:[%s242 + $0x38] sm:$0xf]
        %v305 = vld [vmem:[%s242 + $0x3c] sm:$0xf]
        %v306 = vld [vmem:[%s242 + $0x40] sm:$0xf]
        %v307 = vld [vmem:[%s242 + $0x44] sm:$0xf]
        %v308 = vld [vmem:[%s242 + $0x48] sm:$0xf]
        %v309 = vld [vmem:[%s242 + $0x4c] sm:$0xf]
        %v310 = vld [vmem:[%s242 + $0x50] sm:$0xf]
        %v311 = vld [vmem:[%s242 + $0x54] sm:$0xf]
        %v312 = vld [vmem:[%s242 + $0x58] sm:$0xf]
        %v313 = vld [vmem:[%s242 + $0x5c] sm:$0xf]
        %v314 = vld [vmem:[%s242 + $0x60] sm:$0xf]
        %v315 = vld [vmem:[%s242 + $0x64] sm:$0xf]
        %v316 = vld [vmem:[%s242 + $0x68] sm:$0xf]
        %v317 = vld [vmem:[%s242 + $0x6c] sm:$0xf]
        %v318 = vld [vmem:[%s242 + $0x70] sm:$0xf]
        %v319 = vld [vmem:[%s242 + $0x74] sm:$0xf]
        %v320 = vld [vmem:[%s242 + $0x78] sm:$0xf]
        %v321 = vld [vmem:[%s242 + $0x7c] sm:$0xf]
        %v322 = vld [vmem:[%s1] sm:$0xf]
        %v323 = vld [vmem:[%s1 + $0x4] sm:$0xf]
        %v324 = vld [vmem:[%s1 + $0x8] sm:$0xf]
        %v325 = vld [vmem:[%s1 + $0xc] sm:$0xf]
        %v326 = vld [vmem:[%s1 + $0x10] sm:$0xf]
        %v327 = vld [vmem:[%s1 + $0x14] sm:$0xf]
        %v328 = vld [vmem:[%s1 + $0x18] sm:$0xf]
        %v329 = vld [vmem:[%s1 + $0x1c] sm:$0xf]
        %v330 = vld [vmem:[%s1 + $0x20] sm:$0xf]
        %v331 = vld [vmem:[%s1 + $0x24] sm:$0xf]
        %v332 = vld [vmem:[%s1 + $0x28] sm:$0xf]
        %v333 = vld [vmem:[%s1 + $0x2c] sm:$0xf]
        %v334 = vld [vmem:[%s1 + $0x30] sm:$0xf]
        %v335 = vld [vmem:[%s1 + $0x34] sm:$0xf]
        %v336 = vld [vmem:[%s1 + $0x38] sm:$0xf]
        %v337 = vld [vmem:[%s1 + $0x3c] sm:$0xf]
        %v370 = vunpack.c.l.b16 %v290
        %v371 = vunpack.c.l.b16 %v291
        %v372 = vunpack.c.l.b16 %v292
        %v373 = vunpack.c.l.b16 %v293
        %v374 = vunpack.c.l.b16 %v294
        %v375 = vunpack.c.l.b16 %v295
        %v376 = vunpack.c.l.b16 %v296
        %v377 = vunpack.c.l.b16 %v297
        %v378 = vunpack.c.l.b16 %v298
        %v379 = vunpack.c.l.b16 %v299
        %v380 = vunpack.c.l.b16 %v300
        %v381 = vunpack.c.l.b16 %v301
        %v382 = vunpack.c.l.b16 %v302
        %v383 = vunpack.c.l.b16 %v303
        %v384 = vunpack.c.l.b16 %v304
        %v385 = vunpack.c.l.b16 %v305
        %v386 = vunpack.c.l.b16 %v306
        %v387 = vunpack.c.l.b16 %v307
        %v388 = vunpack.c.l.b16 %v308
        %v389 = vunpack.c.l.b16 %v309
        %v390 = vunpack.c.l.b16 %v310
        %v391 = vunpack.c.l.b16 %v311
        %v392 = vunpack.c.l.b16 %v312
        %v393 = vunpack.c.l.b16 %v313
        %v394 = vunpack.c.l.b16 %v314
        %v395 = vunpack.c.l.b16 %v315
        %v396 = vunpack.c.l.b16 %v316
        %v397 = vunpack.c.l.b16 %v317
        %v398 = vunpack.c.l.b16 %v318
        %v399 = vunpack.c.l.b16 %v319
        %v400 = vunpack.c.l.b16 %v320
        %v401 = vunpack.c.l.b16 %v321
        %v402 = vpack.c.b16 %v371, %v370
        %v403 = vpack.c.b16 %v373, %v372
        %v404 = vpack.c.b16 %v375, %v374
        %v405 = vpack.c.b16 %v377, %v376
        %v406 = vpack.c.b16 %v379, %v378
        %v407 = vpack.c.b16 %v381, %v380
        %v408 = vpack.c.b16 %v383, %v382
        %v409 = vpack.c.b16 %v385, %v384
        %v410 = vpack.c.b16 %v387, %v386
        %v411 = vpack.c.b16 %v389, %v388
        %v412 = vpack.c.b16 %v391, %v390
        %v413 = vpack.c.b16 %v393, %v392
        %v414 = vpack.c.b16 %v395, %v394
        %v415 = vpack.c.b16 %v397, %v396
        %v416 = vpack.c.b16 %v399, %v398
        %v417 = vpack.c.b16 %v401, %v400
        %v450 = vunpack.c.l.b16 %v322
        %v451 = vunpack.c.l.b16 %v323
        %v452 = vunpack.c.l.b16 %v324
        %v453 = vunpack.c.l.b16 %v325
        %v454 = vunpack.c.l.b16 %v326
        %v455 = vunpack.c.l.b16 %v327
        %v456 = vunpack.c.l.b16 %v328
        %v457 = vunpack.c.l.b16 %v329
        %v458 = vunpack.c.l.b16 %v330
        %v459 = vunpack.c.l.b16 %v331
        %v460 = vunpack.c.l.b16 %v332
        %v461 = vunpack.c.l.b16 %v333
        %v462 = vunpack.c.l.b16 %v334
        %v463 = vunpack.c.l.b16 %v335
        %v464 = vunpack.c.l.b16 %v336
        %v465 = vunpack.c.l.b16 %v337
        %v466 = vpack.c.b16 %v451, %v450
        %v467 = vpack.c.b16 %v453, %v452
        %v468 = vpack.c.b16 %v455, %v454
        %v469 = vpack.c.b16 %v457, %v456
        %v470 = vpack.c.b16 %v459, %v458
        %v471 = vpack.c.b16 %v461, %v460
        %v472 = vpack.c.b16 %v463, %v462
        %v473 = vpack.c.b16 %v465, %v464
        %482 = vmatprep.subr.bf16.mxu0 0
        %483 = vmatpush1.bf16.msra.mxu0 %v466
        %484 = vmatprep.subr.bf16.mxu0 0
        %485 = vmatpush1.bf16.msra.mxu0 %v467
        %486 = vmatprep.subr.bf16.mxu0 0
        %487 = vmatpush1.bf16.msra.mxu0 %v468
        %488 = vmatprep.subr.bf16.mxu0 0
        %489 = vmatpush1.bf16.msra.mxu0 %v469
        %490 = vmatprep.subr.bf16.mxu0 0
        %491 = vmatpush1.bf16.msra.mxu0 %v470
        %492 = vmatprep.subr.bf16.mxu0 0
        %493 = vmatpush1.bf16.msra.mxu0 %v471
        %494 = vmatprep.subr.bf16.mxu0 0
        %495 = vmatpush1.bf16.msra.mxu0 %v472
        %496 = vmatprep.subr.bf16.mxu0 0
        %497 = vmatpush1.bf16.msra.mxu0 %v473
        %498 = vmatprep.subr.bf16.mxu0 0
        %499 = vmatpush1.bf16.msra.mxu0 0
        %500 = vmatprep.subr.bf16.mxu0 0
        %501 = vmatpush1.bf16.msra.mxu0 0
        %502 = vmatprep.subr.bf16.mxu0 0
        %503 = vmatpush1.bf16.msra.mxu0 0
        %504 = vmatprep.subr.bf16.mxu0 0
        %505 = vmatpush1.bf16.msra.mxu0 0
        %506 = vmatprep.subr.bf16.mxu0 0
        %507 = vmatpush1.bf16.msra.mxu0 0
        %508 = vmatprep.subr.bf16.mxu0 0
        %509 = vmatpush1.bf16.msra.mxu0 0
        %510 = vmatprep.subr.bf16.mxu0 0
        %511 = vmatpush1.bf16.msra.mxu0 0
        %512 = vmatprep.subr.bf16.mxu0 0
        %513 = vmatpush1.bf16.msra.mxu0 0
        %514 = vmatprep.mubr.bf16.mxu0 0
        %515 = vmatmul.mubr.bf16.gmra.mrb[0].mxu0 %v402
        %v516 = vpop.f32.mrb[0].mxu0
        %v517 = vadd.f32 0.0, %v516
        %v518 = vpop.f32.mrb[0].mxu0
        %v519 = vpop.f32.mrb[0].mxu0
        %v520 = vadd.f32 0.0, %v519
        %v521 = vpop.f32.mrb[0].mxu0
        %522 = vmatprep.mubr.bf16.mxu0 0
        %523 = vmatmul.mubr.bf16.gmra.mrb[0].mxu0 %v403
        %v524 = vpop.f32.mrb[0].mxu0
        %v525 = vadd.f32 0.0, %v524
        %v526 = vpop.f32.mrb[0].mxu0
        %v527 = vpop.f32.mrb[0].mxu0
        %v528 = vadd.f32 0.0, %v527
        %v529 = vpop.f32.mrb[0].mxu0
        %530 = vmatprep.mubr.bf16.mxu0 0
        %531 = vmatmul.mubr.bf16.gmra.mrb[0].mxu0 %v404
        %v532 = vpop.f32.mrb[0].mxu0
        %v533 = vadd.f32 0.0, %v532
        %v534 = vpop.f32.mrb[0].mxu0
        %v535 = vpop.f32.mrb[0].mxu0
        %v536 = vadd.f32 0.0, %v535
        %v537 = vpop.f32.mrb[0].mxu0
        %538 = vmatprep.mubr.bf16.mxu0 0
        %539 = vmatmul.mubr.bf16.gmra.mrb[0].mxu0 %v405
        %v540 = vpop.f32.mrb[0].mxu0
        %v541 = vadd.f32 0.0, %v540
        %v542 = vpop.f32.mrb[0].mxu0
        %v543 = vpop.f32.mrb[0].mxu0
        %v544 = vadd.f32 0.0, %v543
        %v545 = vpop.f32.mrb[0].mxu0
        %546 = vmatprep.mubr.bf16.mxu0 0
        %547 = vmatmul.mubr.bf16.gmra.mrb[0].mxu0 %v406
        %v548 = vpop.f32.mrb[0].mxu0
        %v549 = vadd.f32 0.0, %v548
        %v550 = vpop.f32.mrb[0].mxu0
        %v551 = vpop.f32.mrb[0].mxu0
        %v552 = vadd.f32 0.0, %v551
        %v553 = vpop.f32.mrb[0].mxu0
        %554 = vmatprep.mubr.bf16.mxu0 0
        %555 = vmatmul.mubr.bf16.gmra.mrb[0].mxu0 %v407
        %v556 = vpop.f32.mrb[0].mxu0
        %v557 = vadd.f32 0.0, %v556
        %v558 = vpop.f32.mrb[0].mxu0
        %v559 = vpop.f32.mrb[0].mxu0
        %v560 = vadd.f32 0.0, %v559
        %v561 = vpop.f32.mrb[0].mxu0
        %562 = vmatprep.mubr.bf16.mxu0 0
        %563 = vmatmul.mubr.bf16.gmra.mrb[0].mxu0 %v408
        %v564 = vpop.f32.mrb[0].mxu0
        %v565 = vadd.f32 0.0, %v564
        %v566 = vpop.f32.mrb[0].mxu0
        %v567 = vpop.f32.mrb[0].mxu0
        %v568 = vadd.f32 0.0, %v567
        %v569 = vpop.f32.mrb[0].mxu0
        %570 = vmatprep.mubr.bf16.mxu0 0
        %571 = vmatmul.mubr.bf16.gmra.mrb[0].mxu0 %v409
        %v572 = vpop.f32.mrb[0].mxu0
        %v573 = vadd.f32 0.0, %v572
        %v574 = vpop.f32.mrb[0].mxu0
        %v575 = vpop.f32.mrb[0].mxu0
        %v576 = vadd.f32 0.0, %v575
        %v577 = vpop.f32.mrb[0].mxu0
        %578 = vmatprep.mubr.bf16.mxu0 0
        %579 = vmatmul.mubr.bf16.gmra.mrb[0].mxu0 %v410
        %v580 = vpop.f32.mrb[0].mxu0
        %v581 = vadd.f32 0.0, %v580
        %v582 = vpop.f32.mrb[0].mxu0
        %v583 = vpop.f32.mrb[0].mxu0
        %v584 = vadd.f32 0.0, %v583
        %v585 = vpop.f32.mrb[0].mxu0
        %586 = vmatprep.mubr.bf16.mxu0 0
        %587 = vmatmul.mubr.bf16.gmra.mrb[0].mxu0 %v411
        %v588 = vpop.f32.mrb[0].mxu0
        %v589 = vadd.f32 0.0, %v588
        %v590 = vpop.f32.mrb[0].mxu0
        %v591 = vpop.f32.mrb[0].mxu0
        %v592 = vadd.f32 0.0, %v591
        %v593 = vpop.f32.mrb[0].mxu0
        %594 = vmatprep.mubr.bf16.mxu0 0
        %595 = vmatmul.mubr.bf16.gmra.mrb[0].mxu0 %v412
        %v596 = vpop.f32.mrb[0].mxu0
        %v597 = vadd.f32 0.0, %v596
        %v598 = vpop.f32.mrb[0].mxu0
        %v599 = vpop.f32.mrb[0].mxu0
        %v600 = vadd.f32 0.0, %v599
        %v601 = vpop.f32.mrb[0].mxu0
        %602 = vmatprep.mubr.bf16.mxu0 0
        %603 = vmatmul.mubr.bf16.gmra.mrb[0].mxu0 %v413
        %v604 = vpop.f32.mrb[0].mxu0
        %v605 = vadd.f32 0.0, %v604
        %v606 = vpop.f32.mrb[0].mxu0
        %v607 = vpop.f32.mrb[0].mxu0
        %v608 = vadd.f32 0.0, %v607
        %v609 = vpop.f32.mrb[0].mxu0
        %610 = vmatprep.mubr.bf16.mxu0 0
        %611 = vmatmul.mubr.bf16.gmra.mrb[0].mxu0 %v414
        %v612 = vpop.f32.mrb[0].mxu0
        %v613 = vadd.f32 0.0, %v612
        %v614 = vpop.f32.mrb[0].mxu0
        %v615 = vpop.f32.mrb[0].mxu0
        %v616 = vadd.f32 0.0, %v615
        %v617 = vpop.f32.mrb[0].mxu0
        %618 = vmatprep.mubr.bf16.mxu0 0
        %619 = vmatmul.mubr.bf16.gmra.mrb[0].mxu0 %v415
        %v620 = vpop.f32.mrb[0].mxu0
        %v621 = vadd.f32 0.0, %v620
        %v622 = vpop.f32.mrb[0].mxu0
        %v623 = vpop.f32.mrb[0].mxu0
        %v624 = vadd.f32 0.0, %v623
        %v625 = vpop.f32.mrb[0].mxu0
        %626 = vmatprep.mubr.bf16.mxu0 0
        %627 = vmatmul.mubr.bf16.gmra.mrb[0].mxu0 %v416
        %v628 = vpop.f32.mrb[0].mxu0
        %v629 = vadd.f32 0.0, %v628
        %v630 = vpop.f32.mrb[0].mxu0
        %v631 = vpop.f32.mrb[0].mxu0
        %v632 = vadd.f32 0.0, %v631
        %v633 = vpop.f32.mrb[0].mxu0
        %634 = vmatprep.mubr.bf16.mxu0 0
        %635 = vmatmul.mubr.bf16.gmra.mrb[0].mxu0 %v417
        %v636 = vpop.f32.mrb[0].mxu0
        %v637 = vadd.f32 0.0, %v636
        %v638 = vpop.f32.mrb[0].mxu0
        %v639 = vpop.f32.mrb[0].mxu0
        %v640 = vadd.f32 0.0, %v639
        %v641 = vpop.f32.mrb[0].mxu0
        %642 = vdwg.mxu0
        %v643 = vpack.c.bf16 %v520, %v517
        %v644 = vpack.c.bf16 %v528, %v525
        %v645 = vpack.c.bf16 %v536, %v533
        %v646 = vpack.c.bf16 %v544, %v541
        %v647 = vpack.c.bf16 %v552, %v549
        %v648 = vpack.c.bf16 %v560, %v557
        %v649 = vpack.c.bf16 %v568, %v565
        %v650 = vpack.c.bf16 %v576, %v573
        %v651 = vpack.c.bf16 %v584, %v581
        %v652 = vpack.c.bf16 %v592, %v589
        %v653 = vpack.c.bf16 %v600, %v597
        %v654 = vpack.c.bf16 %v608, %v605
        %v655 = vpack.c.bf16 %v616, %v613
        %v656 = vpack.c.bf16 %v624, %v621
        %v657 = vpack.c.bf16 %v632, %v629
        %v658 = vpack.c.bf16 %v640, %v637
        %v659 = vtanh.bf16.pop %v643
        %v660 = vtanh.bf16.pop %v644
        %v661 = vtanh.bf16.pop %v645
        %v662 = vtanh.bf16.pop %v646
        %v663 = vtanh.bf16.pop %v647
        %v664 = vtanh.bf16.pop %v648
        %v665 = vtanh.bf16.pop %v649
        %v666 = vtanh.bf16.pop %v650
        %v667 = vtanh.bf16.pop %v651
        %v668 = vtanh.bf16.pop %v652
        %v669 = vtanh.bf16.pop %v653
        %v670 = vtanh.bf16.pop %v654
        %v671 = vtanh.bf16.pop %v655
        %v672 = vtanh.bf16.pop %v656
        %v673 = vtanh.bf16.pop %v657
        %v674 = vtanh.bf16.pop %v658
        %v675 = vld [vmem:[%s2] sm:$0xf]
        %v676 = vld [vmem:[%s2 + $0x4] sm:$0xf]
        %v677 = vld [vmem:[%s2 + $0x8] sm:$0xf]
        %v678 = vld [vmem:[%s2 + $0xc] sm:$0xf]
        %v679 = vld [vmem:[%s2 + $0x10] sm:$0xf]
        %v680 = vld [vmem:[%s2 + $0x14] sm:$0xf]
        %v681 = vld [vmem:[%s2 + $0x18] sm:$0xf]
        %v682 = vld [vmem:[%s2 + $0x1c] sm:$0xf]
        %v683 = vld [vmem:[%s2 + $0x20] sm:$0xf]
        %v684 = vld [vmem:[%s2 + $0x24] sm:$0xf]
        %v685 = vld [vmem:[%s2 + $0x28] sm:$0xf]
        %v686 = vld [vmem:[%s2 + $0x2c] sm:$0xf]
        %v687 = vld [vmem:[%s2 + $0x30] sm:$0xf]
        %v688 = vld [vmem:[%s2 + $0x34] sm:$0xf]
        %v689 = vld [vmem:[%s2 + $0x38] sm:$0xf]
        %v690 = vld [vmem:[%s2 + $0x3c] sm:$0xf]
        %v707 = vunpack.c.l.b16 %v675
        %v708 = vunpack.c.l.b16 %v676
        %v709 = vunpack.c.l.b16 %v677
        %v710 = vunpack.c.l.b16 %v678
        %v711 = vunpack.c.l.b16 %v679
        %v712 = vunpack.c.l.b16 %v680
        %v713 = vunpack.c.l.b16 %v681
        %v714 = vunpack.c.l.b16 %v682
        %v715 = vunpack.c.l.b16 %v683
        %v716 = vunpack.c.l.b16 %v684
        %v717 = vunpack.c.l.b16 %v685
        %v718 = vunpack.c.l.b16 %v686
        %v719 = vunpack.c.l.b16 %v687
        %v720 = vunpack.c.l.b16 %v688
        %v721 = vunpack.c.l.b16 %v689
        %v722 = vunpack.c.l.b16 %v690
        %v723 = vpack.c.b16 %v708, %v707
        %v724 = vpack.c.b16 %v710, %v709
        %v725 = vpack.c.b16 %v712, %v711
        %v726 = vpack.c.b16 %v714, %v713
        %v727 = vpack.c.b16 %v716, %v715
        %v728 = vpack.c.b16 %v718, %v717
        %v729 = vpack.c.b16 %v720, %v719
        %v730 = vpack.c.b16 %v722, %v721
        %739 = vmatprep.subr.bf16.mxu0 0
        %740 = vmatpush1.bf16.msra.mxu0 %v723
        %741 = vmatprep.subr.bf16.mxu0 0
        %742 = vmatpush1.bf16.msra.mxu0 %v724
        %743 = vmatprep.subr.bf16.mxu0 0
        %744 = vmatpush1.bf16.msra.mxu0 %v725
        %745 = vmatprep.subr.bf16.mxu0 0
        %746 = vmatpush1.bf16.msra.mxu0 %v726
        %747 = vmatprep.subr.bf16.mxu0 0
        %748 = vmatpush1.bf16.msra.mxu0 %v727
        %749 = vmatprep.subr.bf16.mxu0 0
        %750 = vmatpush1.bf16.msra.mxu0 %v728
        %751 = vmatprep.subr.bf16.mxu0 0
        %752 = vmatpush1.bf16.msra.mxu0 %v729
        %753 = vmatprep.subr.bf16.mxu0 0
        %754 = vmatpush1.bf16.msra.mxu0 %v730
        %755 = vmatprep.subr.bf16.mxu0 0
        %756 = vmatpush1.bf16.msra.mxu0 0
        %757 = vmatprep.subr.bf16.mxu0 0
        %758 = vmatpush1.bf16.msra.mxu0 0
        %759 = vmatprep.subr.bf16.mxu0 0
        %760 = vmatpush1.bf16.msra.mxu0 0
        %761 = vmatprep.subr.bf16.mxu0 0
        %762 = vmatpush1.bf16.msra.mxu0 0
        %763 = vmatprep.subr.bf16.mxu0 0
        %764 = vmatpush1.bf16.msra.mxu0 0
        %765 = vmatprep.subr.bf16.mxu0 0
        %766 = vmatpush1.bf16.msra.mxu0 0
        %767 = vmatprep.subr.bf16.mxu0 0
        %768 = vmatpush1.bf16.msra.mxu0 0
        %769 = vmatprep.subr.bf16.mxu0 0
        %770 = vmatpush1.bf16.msra.mxu0 0
        %771 = vmatprep.mubr.bf16.mxu0 0
        %772 = vmatmul.mubr.bf16.gmra.mrb[0].mxu0 %v659
        %v773 = vpop.f32.mrb[0].mxu0
        %v774 = vadd.f32 0.0, %v773
        %v775 = vpop.f32.mrb[0].mxu0
        %v776 = vpop.f32.mrb[0].mxu0
        %v777 = vadd.f32 0.0, %v776
        %v778 = vpop.f32.mrb[0].mxu0
        %779 = vmatprep.mubr.bf16.mxu0 0
        %780 = vmatmul.mubr.bf16.gmra.mrb[0].mxu0 %v660
        %v781 = vpop.f32.mrb[0].mxu0
        %v782 = vadd.f32 0.0, %v781
        %v783 = vpop.f32.mrb[0].mxu0
        %v784 = vpop.f32.mrb[0].mxu0
        %v785 = vadd.f32 0.0, %v784
        %v786 = vpop.f32.mrb[0].mxu0
        %787 = vmatprep.mubr.bf16.mxu0 0
        %788 = vmatmul.mubr.bf16.gmra.mrb[0].mxu0 %v661
        %v789 = vpop.f32.mrb[0].mxu0
        %v790 = vadd.f32 0.0, %v789
        %v791 = vpop.f32.mrb[0].mxu0
        %v792 = vpop.f32.mrb[0].mxu0
        %v793 = vadd.f32 0.0, %v792
        %v794 = vpop.f32.mrb[0].mxu0
        %795 = vmatprep.mubr.bf16.mxu0 0
        %796 = vmatmul.mubr.bf16.gmra.mrb[0].mxu0 %v662
        %v797 = vpop.f32.mrb[0].mxu0
        %v798 = vadd.f32 0.0, %v797
        %v799 = vpop.f32.mrb[0].mxu0
        %v800 = vpop.f32.mrb[0].mxu0
        %v801 = vadd.f32 0.0, %v800
        %v802 = vpop.f32.mrb[0].mxu0
        %803 = vmatprep.mubr.bf16.mxu0 0
        %804 = vmatmul.mubr.bf16.gmra.mrb[0].mxu0 %v663
        %v805 = vpop.f32.mrb[0].mxu0
        %v806 = vadd.f32 0.0, %v805
        %v807 = vpop.f32.mrb[0].mxu0
        %v808 = vpop.f32.mrb[0].mxu0
        %v809 = vadd.f32 0.0, %v808
        %v810 = vpop.f32.mrb[0].mxu0
        %811 = vmatprep.mubr.bf16.mxu0 0
        %812 = vmatmul.mubr.bf16.gmra.mrb[0].mxu0 %v664
        %v813 = vpop.f32.mrb[0].mxu0
        %v814 = vadd.f32 0.0, %v813
        %v815 = vpop.f32.mrb[0].mxu0
        %v816 = vpop.f32.mrb[0].mxu0
        %v817 = vadd.f32 0.0, %v816
        %v818 = vpop.f32.mrb[0].mxu0
        %819 = vmatprep.mubr.bf16.mxu0 0
        %820 = vmatmul.mubr.bf16.gmra.mrb[0].mxu0 %v665
        %v821 = vpop.f32.mrb[0].mxu0
        %v822 = vadd.f32 0.0, %v821
        %v823 = vpop.f32.mrb[0].mxu0
        %v824 = vpop.f32.mrb[0].mxu0
        %v825 = vadd.f32 0.0, %v824
        %v826 = vpop.f32.mrb[0].mxu0
        %827 = vmatprep.mubr.bf16.mxu0 0
        %828 = vmatmul.mubr.bf16.gmra.mrb[0].mxu0 %v666
        %v829 = vpop.f32.mrb[0].mxu0
        %v830 = vadd.f32 0.0, %v829
        %v831 = vpop.f32.mrb[0].mxu0
        %v832 = vpop.f32.mrb[0].mxu0
        %v833 = vadd.f32 0.0, %v832
        %v834 = vpop.f32.mrb[0].mxu0
        %835 = vmatprep.mubr.bf16.mxu0 0
        %836 = vmatmul.mubr.bf16.gmra.mrb[0].mxu0 %v667
        %v837 = vpop.f32.mrb[0].mxu0
        %v838 = vadd.f32 0.0, %v837
        %v839 = vpop.f32.mrb[0].mxu0
        %v840 = vpop.f32.mrb[0].mxu0
        %v841 = vadd.f32 0.0, %v840
        %v842 = vpop.f32.mrb[0].mxu0
        %843 = vmatprep.mubr.bf16.mxu0 0
        %844 = vmatmul.mubr.bf16.gmra.mrb[0].mxu0 %v668
        %v845 = vpop.f32.mrb[0].mxu0
        %v846 = vadd.f32 0.0, %v845
        %v847 = vpop.f32.mrb[0].mxu0
        %v848 = vpop.f32.mrb[0].mxu0
        %v849 = vadd.f32 0.0, %v848
        %v850 = vpop.f32.mrb[0].mxu0
        %851 = vmatprep.mubr.bf16.mxu0 0
        %852 = vmatmul.mubr.bf16.gmra.mrb[0].mxu0 %v669
        %v853 = vpop.f32.mrb[0].mxu0
        %v854 = vadd.f32 0.0, %v853
        %v855 = vpop.f32.mrb[0].mxu0
        %v856 = vpop.f32.mrb[0].mxu0
        %v857 = vadd.f32 0.0, %v856
        %v858 = vpop.f32.mrb[0].mxu0
        %859 = vmatprep.mubr.bf16.mxu0 0
        %860 = vmatmul.mubr.bf16.gmra.mrb[0].mxu0 %v670
        %v861 = vpop.f32.mrb[0].mxu0
        %v862 = vadd.f32 0.0, %v861
        %v863 = vpop.f32.mrb[0].mxu0
        %v864 = vpop.f32.mrb[0].mxu0
        %v865 = vadd.f32 0.0, %v864
        %v866 = vpop.f32.mrb[0].mxu0
        %867 = vmatprep.mubr.bf16.mxu0 0
        %868 = vmatmul.mubr.bf16.gmra.mrb[0].mxu0 %v671
        %v869 = vpop.f32.mrb[0].mxu0
        %v870 = vadd.f32 0.0, %v869
        %v871 = vpop.f32.mrb[0].mxu0
        %v872 = vpop.f32.mrb[0].mxu0
        %v873 = vadd.f32 0.0, %v872
        %v874 = vpop.f32.mrb[0].mxu0
        %875 = vmatprep.mubr.bf16.mxu0 0
        %876 = vmatmul.mubr.bf16.gmra.mrb[0].mxu0 %v672
        %v877 = vpop.f32.mrb[0].mxu0
        %v878 = vadd.f32 0.0, %v877
        %v879 = vpop.f32.mrb[0].mxu0
        %v880 = vpop.f32.mrb[0].mxu0
        %v881 = vadd.f32 0.0, %v880
        %v882 = vpop.f32.mrb[0].mxu0
        %883 = vmatprep.mubr.bf16.mxu0 0
        %884 = vmatmul.mubr.bf16.gmra.mrb[0].mxu0 %v673
        %v885 = vpop.f32.mrb[0].mxu0
        %v886 = vadd.f32 0.0, %v885
        %v887 = vpop.f32.mrb[0].mxu0
        %v888 = vpop.f32.mrb[0].mxu0
        %v889 = vadd.f32 0.0, %v888
        %v890 = vpop.f32.mrb[0].mxu0
        %891 = vmatprep.mubr.bf16.mxu0 0
        %892 = vmatmul.mubr.bf16.gmra.mrb[0].mxu0 %v674
        %v893 = vpop.f32.mrb[0].mxu0
        %v894 = vadd.f32 0.0, %v893
        %v895 = vpop.f32.mrb[0].mxu0
        %v896 = vpop.f32.mrb[0].mxu0
        %v897 = vadd.f32 0.0, %v896
        %v898 = vpop.f32.mrb[0].mxu0
        %899 = vdwg.mxu0
        %900 = vxpose.xlu0.b32.start [1/16] %v774, 128
        %901 = vxpose.xlu0.b32.cont [2/16] %v777, 128
        %902 = vxpose.xlu0.b32.cont [3/16] 0.0, 128
        %903 = vxpose.xlu0.b32.cont [4/16] 0.0, 128
        %904 = vxpose.xlu0.b32.cont [5/16] 0.0, 128
        %905 = vxpose.xlu0.b32.cont [6/16] 0.0, 128
        %906 = vxpose.xlu0.b32.cont [7/16] 0.0, 128
        %907 = vxpose.xlu0.b32.cont [8/16] 0.0, 128
        %908 = vxpose.xlu0.b32.cont [9/16] 0.0, 128
        %909 = vxpose.xlu0.b32.cont [10/16] 0.0, 128
        %910 = vxpose.xlu0.b32.cont [11/16] 0.0, 128
        %911 = vxpose.xlu0.b32.cont [12/16] 0.0, 128
        %912 = vxpose.xlu0.b32.cont [13/16] 0.0, 128
        %913 = vxpose.xlu0.b32.cont [14/16] 0.0, 128
        %914 = vxpose.xlu0.b32.cont [15/16] 0.0, 128
        %915 = vxpose.xlu0.b32.end [16/16] 0.0, 128
        %v916 = vpop.trf.xlu0
        %v917 = vpop.trf.xlu0
        %v918 = vpop.trf.xlu0
        %v919 = vpop.trf.xlu0
        %v920 = vpop.trf.xlu0
        %v921 = vpop.trf.xlu0
        %v922 = vpop.trf.xlu0
        %v923 = vpop.trf.xlu0
        %v924 = vpop.trf.xlu0
        %v925 = vpop.trf.xlu0
        %v926 = vpop.trf.xlu0
        %v927 = vpop.trf.xlu0
        %v928 = vpop.trf.xlu0
        %v929 = vpop.trf.xlu0
        %v930 = vpop.trf.xlu0
        %v931 = vpop.trf.xlu0
        %932 = vxpose.xlu0.b32.start [1/16] %v782, 128
        %933 = vxpose.xlu0.b32.cont [2/16] %v785, 128
        %934 = vxpose.xlu0.b32.cont [3/16] 0.0, 128
        %935 = vxpose.xlu0.b32.cont [4/16] 0.0, 128
        %936 = vxpose.xlu0.b32.cont [5/16] 0.0, 128
        %937 = vxpose.xlu0.b32.cont [6/16] 0.0, 128
        %938 = vxpose.xlu0.b32.cont [7/16] 0.0, 128
        %939 = vxpose.xlu0.b32.cont [8/16] 0.0, 128
        %940 = vxpose.xlu0.b32.cont [9/16] 0.0, 128
        %941 = vxpose.xlu0.b32.cont [10/16] 0.0, 128
        %942 = vxpose.xlu0.b32.cont [11/16] 0.0, 128
        %943 = vxpose.xlu0.b32.cont [12/16] 0.0, 128
        %944 = vxpose.xlu0.b32.cont [13/16] 0.0, 128
        %945 = vxpose.xlu0.b32.cont [14/16] 0.0, 128
        %946 = vxpose.xlu0.b32.cont [15/16] 0.0, 128
        %947 = vxpose.xlu0.b32.end [16/16] 0.0, 128
        %v948 = vpop.trf.xlu0
        %v949 = vpop.trf.xlu0
        %v950 = vpop.trf.xlu0
        %v951 = vpop.trf.xlu0
        %v952 = vpop.trf.xlu0
        %v953 = vpop.trf.xlu0
        %v954 = vpop.trf.xlu0
        %v955 = vpop.trf.xlu0
        %v956 = vpop.trf.xlu0
        %v957 = vpop.trf.xlu0
        %v958 = vpop.trf.xlu0
        %v959 = vpop.trf.xlu0
        %v960 = vpop.trf.xlu0
        %v961 = vpop.trf.xlu0
        %v962 = vpop.trf.xlu0
        %v963 = vpop.trf.xlu0
        %964 = vxpose.xlu0.b32.start [1/16] %v790, 128
        %965 = vxpose.xlu0.b32.cont [2/16] %v793, 128
        %966 = vxpose.xlu0.b32.cont [3/16] 0.0, 128
        %967 = vxpose.xlu0.b32.cont [4/16] 0.0, 128
        %968 = vxpose.xlu0.b32.cont [5/16] 0.0, 128
        %969 = vxpose.xlu0.b32.cont [6/16] 0.0, 128
        %970 = vxpose.xlu0.b32.cont [7/16] 0.0, 128
        %971 = vxpose.xlu0.b32.cont [8/16] 0.0, 128
        %972 = vxpose.xlu0.b32.cont [9/16] 0.0, 128
        %973 = vxpose.xlu0.b32.cont [10/16] 0.0, 128
        %974 = vxpose.xlu0.b32.cont [11/16] 0.0, 128
        %975 = vxpose.xlu0.b32.cont [12/16] 0.0, 128
        %976 = vxpose.xlu0.b32.cont [13/16] 0.0, 128
        %977 = vxpose.xlu0.b32.cont [14/16] 0.0, 128
        %978 = vxpose.xlu0.b32.cont [15/16] 0.0, 128
        %979 = vxpose.xlu0.b32.end [16/16] 0.0, 128
        %v980 = vpop.trf.xlu0
        %v981 = vpop.trf.xlu0
        %v982 = vpop.trf.xlu0
        %v983 = vpop.trf.xlu0
        %v984 = vpop.trf.xlu0
        %v985 = vpop.trf.xlu0
        %v986 = vpop.trf.xlu0
        %v987 = vpop.trf.xlu0
        %v988 = vpop.trf.xlu0
        %v989 = vpop.trf.xlu0
        %v990 = vpop.trf.xlu0
        %v991 = vpop.trf.xlu0
        %v992 = vpop.trf.xlu0
        %v993 = vpop.trf.xlu0
        %v994 = vpop.trf.xlu0
        %v995 = vpop.trf.xlu0
        %996 = vxpose.xlu0.b32.start [1/16] %v798, 128
        %997 = vxpose.xlu0.b32.cont [2/16] %v801, 128
        %998 = vxpose.xlu0.b32.cont [3/16] 0.0, 128
        %999 = vxpose.xlu0.b32.cont [4/16] 0.0, 128
        %1000 = vxpose.xlu0.b32.cont [5/16] 0.0, 128
        %1001 = vxpose.xlu0.b32.cont [6/16] 0.0, 128
        %1002 = vxpose.xlu0.b32.cont [7/16] 0.0, 128
        %1003 = vxpose.xlu0.b32.cont [8/16] 0.0, 128
        %1004 = vxpose.xlu0.b32.cont [9/16] 0.0, 128
        %1005 = vxpose.xlu0.b32.cont [10/16] 0.0, 128
        %1006 = vxpose.xlu0.b32.cont [11/16] 0.0, 128
        %1007 = vxpose.xlu0.b32.cont [12/16] 0.0, 128
        %1008 = vxpose.xlu0.b32.cont [13/16] 0.0, 128
        %1009 = vxpose.xlu0.b32.cont [14/16] 0.0, 128
        %1010 = vxpose.xlu0.b32.cont [15/16] 0.0, 128
        %1011 = vxpose.xlu0.b32.end [16/16] 0.0, 128
        %v1012 = vpop.trf.xlu0
        %v1013 = vpop.trf.xlu0
        %v1014 = vpop.trf.xlu0
        %v1015 = vpop.trf.xlu0
        %v1016 = vpop.trf.xlu0
        %v1017 = vpop.trf.xlu0
        %v1018 = vpop.trf.xlu0
        %v1019 = vpop.trf.xlu0
        %v1020 = vpop.trf.xlu0
        %v1021 = vpop.trf.xlu0
        %v1022 = vpop.trf.xlu0
        %v1023 = vpop.trf.xlu0
        %v1024 = vpop.trf.xlu0
        %v1025 = vpop.trf.xlu0
        %v1026 = vpop.trf.xlu0
        %v1027 = vpop.trf.xlu0
        %1028 = vxpose.xlu0.b32.start [1/16] %v806, 128
        %1029 = vxpose.xlu0.b32.cont [2/16] %v809, 128
        %1030 = vxpose.xlu0.b32.cont [3/16] 0.0, 128
        %1031 = vxpose.xlu0.b32.cont [4/16] 0.0, 128
        %1032 = vxpose.xlu0.b32.cont [5/16] 0.0, 128
        %1033 = vxpose.xlu0.b32.cont [6/16] 0.0, 128
        %1034 = vxpose.xlu0.b32.cont [7/16] 0.0, 128
        %1035 = vxpose.xlu0.b32.cont [8/16] 0.0, 128
        %1036 = vxpose.xlu0.b32.cont [9/16] 0.0, 128
        %1037 = vxpose.xlu0.b32.cont [10/16] 0.0, 128
        %1038 = vxpose.xlu0.b32.cont [11/16] 0.0, 128
        %1039 = vxpose.xlu0.b32.cont [12/16] 0.0, 128
        %1040 = vxpose.xlu0.b32.cont [13/16] 0.0, 128
        %1041 = vxpose.xlu0.b32.cont [14/16] 0.0, 128
        %1042 = vxpose.xlu0.b32.cont [15/16] 0.0, 128
        %1043 = vxpose.xlu0.b32.end [16/16] 0.0, 128
        %v1044 = vpop.trf.xlu0
        %v1045 = vpop.trf.xlu0
        %v1046 = vpop.trf.xlu0
        %v1047 = vpop.trf.xlu0
        %v1048 = vpop.trf.xlu0
        %v1049 = vpop.trf.xlu0
        %v1050 = vpop.trf.xlu0
        %v1051 = vpop.trf.xlu0
        %v1052 = vpop.trf.xlu0
        %v1053 = vpop.trf.xlu0
        %v1054 = vpop.trf.xlu0
        %v1055 = vpop.trf.xlu0
        %v1056 = vpop.trf.xlu0
        %v1057 = vpop.trf.xlu0
        %v1058 = vpop.trf.xlu0
        %v1059 = vpop.trf.xlu0
        %1060 = vxpose.xlu0.b32.start [1/16] %v814, 128
        %1061 = vxpose.xlu0.b32.cont [2/16] %v817, 128
        %1062 = vxpose.xlu0.b32.cont [3/16] 0.0, 128
        %1063 = vxpose.xlu0.b32.cont [4/16] 0.0, 128
        %1064 = vxpose.xlu0.b32.cont [5/16] 0.0, 128
        %1065 = vxpose.xlu0.b32.cont [6/16] 0.0, 128
        %1066 = vxpose.xlu0.b32.cont [7/16] 0.0, 128
        %1067 = vxpose.xlu0.b32.cont [8/16] 0.0, 128
        %1068 = vxpose.xlu0.b32.cont [9/16] 0.0, 128
        %1069 = vxpose.xlu0.b32.cont [10/16] 0.0, 128
        %1070 = vxpose.xlu0.b32.cont [11/16] 0.0, 128
        %1071 = vxpose.xlu0.b32.cont [12/16] 0.0, 128
        %1072 = vxpose.xlu0.b32.cont [13/16] 0.0, 128
        %1073 = vxpose.xlu0.b32.cont [14/16] 0.0, 128
        %1074 = vxpose.xlu0.b32.cont [15/16] 0.0, 128
        %1075 = vxpose.xlu0.b32.end [16/16] 0.0, 128
        %v1076 = vpop.trf.xlu0
        %v1077 = vpop.trf.xlu0
        %v1078 = vpop.trf.xlu0
        %v1079 = vpop.trf.xlu0
        %v1080 = vpop.trf.xlu0
        %v1081 = vpop.trf.xlu0
        %v1082 = vpop.trf.xlu0
        %v1083 = vpop.trf.xlu0
        %v1084 = vpop.trf.xlu0
        %v1085 = vpop.trf.xlu0
        %v1086 = vpop.trf.xlu0
        %v1087 = vpop.trf.xlu0
        %v1088 = vpop.trf.xlu0
        %v1089 = vpop.trf.xlu0
        %v1090 = vpop.trf.xlu0
        %v1091 = vpop.trf.xlu0
        %1092 = vxpose.xlu0.b32.start [1/16] %v822, 128
        %1093 = vxpose.xlu0.b32.cont [2/16] %v825, 128
        %1094 = vxpose.xlu0.b32.cont [3/16] 0.0, 128
        %1095 = vxpose.xlu0.b32.cont [4/16] 0.0, 128
        %1096 = vxpose.xlu0.b32.cont [5/16] 0.0, 128
        %1097 = vxpose.xlu0.b32.cont [6/16] 0.0, 128
        %1098 = vxpose.xlu0.b32.cont [7/16] 0.0, 128
        %1099 = vxpose.xlu0.b32.cont [8/16] 0.0, 128
        %1100 = vxpose.xlu0.b32.cont [9/16] 0.0, 128
        %1101 = vxpose.xlu0.b32.cont [10/16] 0.0, 128
        %1102 = vxpose.xlu0.b32.cont [11/16] 0.0, 128
        %1103 = vxpose.xlu0.b32.cont [12/16] 0.0, 128
        %1104 = vxpose.xlu0.b32.cont [13/16] 0.0, 128
        %1105 = vxpose.xlu0.b32.cont [14/16] 0.0, 128
        %1106 = vxpose.xlu0.b32.cont [15/16] 0.0, 128
        %1107 = vxpose.xlu0.b32.end [16/16] 0.0, 128
        %v1108 = vpop.trf.xlu0
        %v1109 = vpop.trf.xlu0
        %v1110 = vpop.trf.xlu0
        %v1111 = vpop.trf.xlu0
        %v1112 = vpop.trf.xlu0
        %v1113 = vpop.trf.xlu0
        %v1114 = vpop.trf.xlu0
        %v1115 = vpop.trf.xlu0
        %v1116 = vpop.trf.xlu0
        %v1117 = vpop.trf.xlu0
        %v1118 = vpop.trf.xlu0
        %v1119 = vpop.trf.xlu0
        %v1120 = vpop.trf.xlu0
        %v1121 = vpop.trf.xlu0
        %v1122 = vpop.trf.xlu0
        %v1123 = vpop.trf.xlu0
        %1124 = vxpose.xlu0.b32.start [1/16] %v830, 128
        %1125 = vxpose.xlu0.b32.cont [2/16] %v833, 128
        %1126 = vxpose.xlu0.b32.cont [3/16] 0.0, 128
        %1127 = vxpose.xlu0.b32.cont [4/16] 0.0, 128
        %1128 = vxpose.xlu0.b32.cont [5/16] 0.0, 128
        %1129 = vxpose.xlu0.b32.cont [6/16] 0.0, 128
        %1130 = vxpose.xlu0.b32.cont [7/16] 0.0, 128
        %1131 = vxpose.xlu0.b32.cont [8/16] 0.0, 128
        %1132 = vxpose.xlu0.b32.cont [9/16] 0.0, 128
        %1133 = vxpose.xlu0.b32.cont [10/16] 0.0, 128
        %1134 = vxpose.xlu0.b32.cont [11/16] 0.0, 128
        %1135 = vxpose.xlu0.b32.cont [12/16] 0.0, 128
        %1136 = vxpose.xlu0.b32.cont [13/16] 0.0, 128
        %1137 = vxpose.xlu0.b32.cont [14/16] 0.0, 128
        %1138 = vxpose.xlu0.b32.cont [15/16] 0.0, 128
        %1139 = vxpose.xlu0.b32.end [16/16] 0.0, 128
        %v1140 = vpop.trf.xlu0
        %v1141 = vpop.trf.xlu0
        %v1142 = vpop.trf.xlu0
        %v1143 = vpop.trf.xlu0
        %v1144 = vpop.trf.xlu0
        %v1145 = vpop.trf.xlu0
        %v1146 = vpop.trf.xlu0
        %v1147 = vpop.trf.xlu0
        %v1148 = vpop.trf.xlu0
        %v1149 = vpop.trf.xlu0
        %v1150 = vpop.trf.xlu0
        %v1151 = vpop.trf.xlu0
        %v1152 = vpop.trf.xlu0
        %v1153 = vpop.trf.xlu0
        %v1154 = vpop.trf.xlu0
        %v1155 = vpop.trf.xlu0
        %1156 = vxpose.xlu0.b32.start [1/16] %v838, 128
        %1157 = vxpose.xlu0.b32.cont [2/16] %v841, 128
        %1158 = vxpose.xlu0.b32.cont [3/16] 0.0, 128
        %1159 = vxpose.xlu0.b32.cont [4/16] 0.0, 128
        %1160 = vxpose.xlu0.b32.cont [5/16] 0.0, 128
        %1161 = vxpose.xlu0.b32.cont [6/16] 0.0, 128
        %1162 = vxpose.xlu0.b32.cont [7/16] 0.0, 128
        %1163 = vxpose.xlu0.b32.cont [8/16] 0.0, 128
        %1164 = vxpose.xlu0.b32.cont [9/16] 0.0, 128
        %1165 = vxpose.xlu0.b32.cont [10/16] 0.0, 128
        %1166 = vxpose.xlu0.b32.cont [11/16] 0.0, 128
        %1167 = vxpose.xlu0.b32.cont [12/16] 0.0, 128
        %1168 = vxpose.xlu0.b32.cont [13/16] 0.0, 128
        %1169 = vxpose.xlu0.b32.cont [14/16] 0.0, 128
        %1170 = vxpose.xlu0.b32.cont [15/16] 0.0, 128
        %1171 = vxpose.xlu0.b32.end [16/16] 0.0, 128
        %v1172 = vpop.trf.xlu0
        %v1173 = vpop.trf.xlu0
        %v1174 = vpop.trf.xlu0
        %v1175 = vpop.trf.xlu0
        %v1176 = vpop.trf.xlu0
        %v1177 = vpop.trf.xlu0
        %v1178 = vpop.trf.xlu0
        %v1179 = vpop.trf.xlu0
        %v1180 = vpop.trf.xlu0
        %v1181 = vpop.trf.xlu0
        %v1182 = vpop.trf.xlu0
        %v1183 = vpop.trf.xlu0
        %v1184 = vpop.trf.xlu0
        %v1185 = vpop.trf.xlu0
        %v1186 = vpop.trf.xlu0
        %v1187 = vpop.trf.xlu0
        %1188 = vxpose.xlu0.b32.start [1/16] %v846, 128
        %1189 = vxpose.xlu0.b32.cont [2/16] %v849, 128
        %1190 = vxpose.xlu0.b32.cont [3/16] 0.0, 128
        %1191 = vxpose.xlu0.b32.cont [4/16] 0.0, 128
        %1192 = vxpose.xlu0.b32.cont [5/16] 0.0, 128
        %1193 = vxpose.xlu0.b32.cont [6/16] 0.0, 128
        %1194 = vxpose.xlu0.b32.cont [7/16] 0.0, 128
        %1195 = vxpose.xlu0.b32.cont [8/16] 0.0, 128
        %1196 = vxpose.xlu0.b32.cont [9/16] 0.0, 128
        %1197 = vxpose.xlu0.b32.cont [10/16] 0.0, 128
        %1198 = vxpose.xlu0.b32.cont [11/16] 0.0, 128
        %1199 = vxpose.xlu0.b32.cont [12/16] 0.0, 128
        %1200 = vxpose.xlu0.b32.cont [13/16] 0.0, 128
        %1201 = vxpose.xlu0.b32.cont [14/16] 0.0, 128
        %1202 = vxpose.xlu0.b32.cont [15/16] 0.0, 128
        %1203 = vxpose.xlu0.b32.end [16/16] 0.0, 128
        %v1204 = vpop.trf.xlu0
        %v1205 = vpop.trf.xlu0
        %v1206 = vpop.trf.xlu0
        %v1207 = vpop.trf.xlu0
        %v1208 = vpop.trf.xlu0
        %v1209 = vpop.trf.xlu0
        %v1210 = vpop.trf.xlu0
        %v1211 = vpop.trf.xlu0
        %v1212 = vpop.trf.xlu0
        %v1213 = vpop.trf.xlu0
        %v1214 = vpop.trf.xlu0
        %v1215 = vpop.trf.xlu0
        %v1216 = vpop.trf.xlu0
        %v1217 = vpop.trf.xlu0
        %v1218 = vpop.trf.xlu0
        %v1219 = vpop.trf.xlu0
        %1220 = vxpose.xlu0.b32.start [1/16] %v854, 128
        %1221 = vxpose.xlu0.b32.cont [2/16] %v857, 128
        %1222 = vxpose.xlu0.b32.cont [3/16] 0.0, 128
        %1223 = vxpose.xlu0.b32.cont [4/16] 0.0, 128
        %1224 = vxpose.xlu0.b32.cont [5/16] 0.0, 128
        %1225 = vxpose.xlu0.b32.cont [6/16] 0.0, 128
        %1226 = vxpose.xlu0.b32.cont [7/16] 0.0, 128
        %1227 = vxpose.xlu0.b32.cont [8/16] 0.0, 128
        %1228 = vxpose.xlu0.b32.cont [9/16] 0.0, 128
        %1229 = vxpose.xlu0.b32.cont [10/16] 0.0, 128
        %1230 = vxpose.xlu0.b32.cont [11/16] 0.0, 128
        %1231 = vxpose.xlu0.b32.cont [12/16] 0.0, 128
        %1232 = vxpose.xlu0.b32.cont [13/16] 0.0, 128
        %1233 = vxpose.xlu0.b32.cont [14/16] 0.0, 128
        %1234 = vxpose.xlu0.b32.cont [15/16] 0.0, 128
        %1235 = vxpose.xlu0.b32.end [16/16] 0.0, 128
        %v1236 = vpop.trf.xlu0
        %v1237 = vpop.trf.xlu0
        %v1238 = vpop.trf.xlu0
        %v1239 = vpop.trf.xlu0
        %v1240 = vpop.trf.xlu0
        %v1241 = vpop.trf.xlu0
        %v1242 = vpop.trf.xlu0
        %v1243 = vpop.trf.xlu0
        %v1244 = vpop.trf.xlu0
        %v1245 = vpop.trf.xlu0
        %v1246 = vpop.trf.xlu0
        %v1247 = vpop.trf.xlu0
        %v1248 = vpop.trf.xlu0
        %v1249 = vpop.trf.xlu0
        %v1250 = vpop.trf.xlu0
        %v1251 = vpop.trf.xlu0
        %1252 = vxpose.xlu0.b32.start [1/16] %v862, 128
        %1253 = vxpose.xlu0.b32.cont [2/16] %v865, 128
        %1254 = vxpose.xlu0.b32.cont [3/16] 0.0, 128
        %1255 = vxpose.xlu0.b32.cont [4/16] 0.0, 128
        %1256 = vxpose.xlu0.b32.cont [5/16] 0.0, 128
        %1257 = vxpose.xlu0.b32.cont [6/16] 0.0, 128
        %1258 = vxpose.xlu0.b32.cont [7/16] 0.0, 128
        %1259 = vxpose.xlu0.b32.cont [8/16] 0.0, 128
        %1260 = vxpose.xlu0.b32.cont [9/16] 0.0, 128
        %1261 = vxpose.xlu0.b32.cont [10/16] 0.0, 128
        %1262 = vxpose.xlu0.b32.cont [11/16] 0.0, 128
        %1263 = vxpose.xlu0.b32.cont [12/16] 0.0, 128
        %1264 = vxpose.xlu0.b32.cont [13/16] 0.0, 128
        %1265 = vxpose.xlu0.b32.cont [14/16] 0.0, 128
        %1266 = vxpose.xlu0.b32.cont [15/16] 0.0, 128
        %1267 = vxpose.xlu0.b32.end [16/16] 0.0, 128
        %v1268 = vpop.trf.xlu0
        %v1269 = vpop.trf.xlu0
        %v1270 = vpop.trf.xlu0
        %v1271 = vpop.trf.xlu0
        %v1272 = vpop.trf.xlu0
        %v1273 = vpop.trf.xlu0
        %v1274 = vpop.trf.xlu0
        %v1275 = vpop.trf.xlu0
        %v1276 = vpop.trf.xlu0
        %v1277 = vpop.trf.xlu0
        %v1278 = vpop.trf.xlu0
        %v1279 = vpop.trf.xlu0
        %v1280 = vpop.trf.xlu0
        %v1281 = vpop.trf.xlu0
        %v1282 = vpop.trf.xlu0
        %v1283 = vpop.trf.xlu0
        %1284 = vxpose.xlu0.b32.start [1/16] %v870, 128
        %1285 = vxpose.xlu0.b32.cont [2/16] %v873, 128
        %1286 = vxpose.xlu0.b32.cont [3/16] 0.0, 128
        %1287 = vxpose.xlu0.b32.cont [4/16] 0.0, 128
        %1288 = vxpose.xlu0.b32.cont [5/16] 0.0, 128
        %1289 = vxpose.xlu0.b32.cont [6/16] 0.0, 128
        %1290 = vxpose.xlu0.b32.cont [7/16] 0.0, 128
        %1291 = vxpose.xlu0.b32.cont [8/16] 0.0, 128
        %1292 = vxpose.xlu0.b32.cont [9/16] 0.0, 128
        %1293 = vxpose.xlu0.b32.cont [10/16] 0.0, 128
        %1294 = vxpose.xlu0.b32.cont [11/16] 0.0, 128
        %1295 = vxpose.xlu0.b32.cont [12/16] 0.0, 128
        %1296 = vxpose.xlu0.b32.cont [13/16] 0.0, 128
        %1297 = vxpose.xlu0.b32.cont [14/16] 0.0, 128
        %1298 = vxpose.xlu0.b32.cont [15/16] 0.0, 128
        %1299 = vxpose.xlu0.b32.end [16/16] 0.0, 128
        %v1300 = vpop.trf.xlu0
        %v1301 = vpop.trf.xlu0
        %v1302 = vpop.trf.xlu0
        %v1303 = vpop.trf.xlu0
        %v1304 = vpop.trf.xlu0
        %v1305 = vpop.trf.xlu0
        %v1306 = vpop.trf.xlu0
        %v1307 = vpop.trf.xlu0
        %v1308 = vpop.trf.xlu0
        %v1309 = vpop.trf.xlu0
        %v1310 = vpop.trf.xlu0
        %v1311 = vpop.trf.xlu0
        %v1312 = vpop.trf.xlu0
        %v1313 = vpop.trf.xlu0
        %v1314 = vpop.trf.xlu0
        %v1315 = vpop.trf.xlu0
        %1316 = vxpose.xlu0.b32.start [1/16] %v878, 128
        %1317 = vxpose.xlu0.b32.cont [2/16] %v881, 128
        %1318 = vxpose.xlu0.b32.cont [3/16] 0.0, 128
        %1319 = vxpose.xlu0.b32.cont [4/16] 0.0, 128
        %1320 = vxpose.xlu0.b32.cont [5/16] 0.0, 128
        %1321 = vxpose.xlu0.b32.cont [6/16] 0.0, 128
        %1322 = vxpose.xlu0.b32.cont [7/16] 0.0, 128
        %1323 = vxpose.xlu0.b32.cont [8/16] 0.0, 128
        %1324 = vxpose.xlu0.b32.cont [9/16] 0.0, 128
        %1325 = vxpose.xlu0.b32.cont [10/16] 0.0, 128
        %1326 = vxpose.xlu0.b32.cont [11/16] 0.0, 128
        %1327 = vxpose.xlu0.b32.cont [12/16] 0.0, 128
        %1328 = vxpose.xlu0.b32.cont [13/16] 0.0, 128
        %1329 = vxpose.xlu0.b32.cont [14/16] 0.0, 128
        %1330 = vxpose.xlu0.b32.cont [15/16] 0.0, 128
        %1331 = vxpose.xlu0.b32.end [16/16] 0.0, 128
        %v1332 = vpop.trf.xlu0
        %v1333 = vpop.trf.xlu0
        %v1334 = vpop.trf.xlu0
        %v1335 = vpop.trf.xlu0
        %v1336 = vpop.trf.xlu0
        %v1337 = vpop.trf.xlu0
        %v1338 = vpop.trf.xlu0
        %v1339 = vpop.trf.xlu0
        %v1340 = vpop.trf.xlu0
        %v1341 = vpop.trf.xlu0
        %v1342 = vpop.trf.xlu0
        %v1343 = vpop.trf.xlu0
        %v1344 = vpop.trf.xlu0
        %v1345 = vpop.trf.xlu0
        %v1346 = vpop.trf.xlu0
        %v1347 = vpop.trf.xlu0
        %1348 = vxpose.xlu0.b32.start [1/16] %v886, 128
        %1349 = vxpose.xlu0.b32.cont [2/16] %v889, 128
        %1350 = vxpose.xlu0.b32.cont [3/16] 0.0, 128
        %1351 = vxpose.xlu0.b32.cont [4/16] 0.0, 128
        %1352 = vxpose.xlu0.b32.cont [5/16] 0.0, 128
        %1353 = vxpose.xlu0.b32.cont [6/16] 0.0, 128
        %1354 = vxpose.xlu0.b32.cont [7/16] 0.0, 128
        %1355 = vxpose.xlu0.b32.cont [8/16] 0.0, 128
        %1356 = vxpose.xlu0.b32.cont [9/16] 0.0, 128
        %1357 = vxpose.xlu0.b32.cont [10/16] 0.0, 128
        %1358 = vxpose.xlu0.b32.cont [11/16] 0.0, 128
        %1359 = vxpose.xlu0.b32.cont [12/16] 0.0, 128
        %1360 = vxpose.xlu0.b32.cont [13/16] 0.0, 128
        %1361 = vxpose.xlu0.b32.cont [14/16] 0.0, 128
        %1362 = vxpose.xlu0.b32.cont [15/16] 0.0, 128
        %1363 = vxpose.xlu0.b32.end [16/16] 0.0, 128
        %v1364 = vpop.trf.xlu0
        %v1365 = vpop.trf.xlu0
        %v1366 = vpop.trf.xlu0
        %v1367 = vpop.trf.xlu0
        %v1368 = vpop.trf.xlu0
        %v1369 = vpop.trf.xlu0
        %v1370 = vpop.trf.xlu0
        %v1371 = vpop.trf.xlu0
        %v1372 = vpop.trf.xlu0
        %v1373 = vpop.trf.xlu0
        %v1374 = vpop.trf.xlu0
        %v1375 = vpop.trf.xlu0
        %v1376 = vpop.trf.xlu0
        %v1377 = vpop.trf.xlu0
        %v1378 = vpop.trf.xlu0
        %v1379 = vpop.trf.xlu0
        %1380 = vxpose.xlu0.b32.start [1/16] %v894, 128
        %1381 = vxpose.xlu0.b32.cont [2/16] %v897, 128
        %1382 = vxpose.xlu0.b32.cont [3/16] 0.0, 128
        %1383 = vxpose.xlu0.b32.cont [4/16] 0.0, 128
        %1384 = vxpose.xlu0.b32.cont [5/16] 0.0, 128
        %1385 = vxpose.xlu0.b32.cont [6/16] 0.0, 128
        %1386 = vxpose.xlu0.b32.cont [7/16] 0.0, 128
        %1387 = vxpose.xlu0.b32.cont [8/16] 0.0, 128
        %1388 = vxpose.xlu0.b32.cont [9/16] 0.0, 128
        %1389 = vxpose.xlu0.b32.cont [10/16] 0.0, 128
        %1390 = vxpose.xlu0.b32.cont [11/16] 0.0, 128
        %1391 = vxpose.xlu0.b32.cont [12/16] 0.0, 128
        %1392 = vxpose.xlu0.b32.cont [13/16] 0.0, 128
        %1393 = vxpose.xlu0.b32.cont [14/16] 0.0, 128
        %1394 = vxpose.xlu0.b32.cont [15/16] 0.0, 128
        %1395 = vxpose.xlu0.b32.end [16/16] 0.0, 128
        %v1396 = vpop.trf.xlu0
        %v1397 = vpop.trf.xlu0
        %v1398 = vpop.trf.xlu0
        %v1399 = vpop.trf.xlu0
        %v1400 = vpop.trf.xlu0
        %v1401 = vpop.trf.xlu0
        %v1402 = vpop.trf.xlu0
        %v1403 = vpop.trf.xlu0
        %v1404 = vpop.trf.xlu0
        %v1405 = vpop.trf.xlu0
        %v1406 = vpop.trf.xlu0
        %v1407 = vpop.trf.xlu0
        %v1408 = vpop.trf.xlu0
        %v1409 = vpop.trf.xlu0
        %v1410 = vpop.trf.xlu0
        %v1411 = vpop.trf.xlu0
        %vm1412 = vcmask 123904
        %v1413 = vsel %vm1412, %v916, -inf
        %1414 = vmax.xlane.f32.xlu0 %v1413
        %v1415 = vpop.xlane.xlu0 %1414
        %v1416 = vsel %vm1412, %v948, -inf
        %1417 = vmax.xlane.f32.xlu0 %v1416
        %v1418 = vpop.xlane.xlu0 %1417
        %v1419 = vsel %vm1412, %v980, -inf
        %1420 = vmax.xlane.f32.xlu0 %v1419
        %v1421 = vpop.xlane.xlu0 %1420
        %v1422 = vsel %vm1412, %v1012, -inf
        %1423 = vmax.xlane.f32.xlu0 %v1422
        %v1424 = vpop.xlane.xlu0 %1423
        %v1425 = vsel %vm1412, %v1044, -inf
        %1426 = vmax.xlane.f32.xlu0 %v1425
        %v1427 = vpop.xlane.xlu0 %1426
        %v1428 = vsel %vm1412, %v1076, -inf
        %1429 = vmax.xlane.f32.xlu0 %v1428
        %v1430 = vpop.xlane.xlu0 %1429
        %v1431 = vsel %vm1412, %v1108, -inf
        %1432 = vmax.xlane.f32.xlu0 %v1431
        %v1433 = vpop.xlane.xlu0 %1432
        %v1434 = vsel %vm1412, %v1140, -inf
        %1435 = vmax.xlane.f32.xlu0 %v1434
        %v1436 = vpop.xlane.xlu0 %1435
        %v1437 = vsel %vm1412, %v1172, -inf
        %1438 = vmax.xlane.f32.xlu0 %v1437
        %v1439 = vpop.xlane.xlu0 %1438
        %v1440 = vsel %vm1412, %v1204, -inf
        %1441 = vmax.xlane.f32.xlu0 %v1440
        %v1442 = vpop.xlane.xlu0 %1441
        %v1443 = vsel %vm1412, %v1236, -inf
        %1444 = vmax.xlane.f32.xlu0 %v1443
        %v1445 = vpop.xlane.xlu0 %1444
        %v1446 = vsel %vm1412, %v1268, -inf
        %1447 = vmax.xlane.f32.xlu0 %v1446
        %v1448 = vpop.xlane.xlu0 %1447
        %v1449 = vsel %vm1412, %v1300, -inf
        %1450 = vmax.xlane.f32.xlu0 %v1449
        %v1451 = vpop.xlane.xlu0 %1450
        %v1452 = vsel %vm1412, %v1332, -inf
        %1453 = vmax.xlane.f32.xlu0 %v1452
        %v1454 = vpop.xlane.xlu0 %1453
        %v1455 = vsel %vm1412, %v1364, -inf
        %1456 = vmax.xlane.f32.xlu0 %v1455
        %v1457 = vpop.xlane.xlu0 %1456
        %v1458 = vsel %vm1412, %v1396, -inf
        %1459 = vmax.xlane.f32.xlu0 %v1458
        %v1460 = vpop.xlane.xlu0 %1459
        %v1461 = vsub.f32 %v916, %v1415
        %v1462 = vsub.f32 %v948, %v1418
        %v1463 = vsub.f32 %v980, %v1421
        %v1464 = vsub.f32 %v1012, %v1424
        %v1465 = vsub.f32 %v1044, %v1427
        %v1466 = vsub.f32 %v1076, %v1430
        %v1467 = vsub.f32 %v1108, %v1433
        %v1468 = vsub.f32 %v1140, %v1436
        %v1469 = vsub.f32 %v1172, %v1439
        %v1470 = vsub.f32 %v1204, %v1442
        %v1471 = vsub.f32 %v1236, %v1445
        %v1472 = vsub.f32 %v1268, %v1448
        %v1473 = vsub.f32 %v1300, %v1451
        %v1474 = vsub.f32 %v1332, %v1454
        %v1475 = vsub.f32 %v1364, %v1457
        %v1476 = vsub.f32 %v1396, %v1460
        %v1477 = vmul.f32 %v1461, 1.442695
        %v1478 = vpow.pop %v1477
        %v1479 = vmul.f32 %v1462, 1.442695
        %v1480 = vpow.pop %v1479
        %v1481 = vmul.f32 %v1463, 1.442695
        %v1482 = vpow.pop %v1481
        %v1483 = vmul.f32 %v1464, 1.442695
        %v1484 = vpow.pop %v1483
        %v1485 = vmul.f32 %v1465, 1.442695
        %v1486 = vpow.pop %v1485
        %v1487 = vmul.f32 %v1466, 1.442695
        %v1488 = vpow.pop %v1487
        %v1489 = vmul.f32 %v1467, 1.442695
        %v1490 = vpow.pop %v1489
        %v1491 = vmul.f32 %v1468, 1.442695
        %v1492 = vpow.pop %v1491
        %v1493 = vmul.f32 %v1469, 1.442695
        %v1494 = vpow.pop %v1493
        %v1495 = vmul.f32 %v1470, 1.442695
        %v1496 = vpow.pop %v1495
        %v1497 = vmul.f32 %v1471, 1.442695
        %v1498 = vpow.pop %v1497
        %v1499 = vmul.f32 %v1472, 1.442695
        %v1500 = vpow.pop %v1499
        %v1501 = vmul.f32 %v1473, 1.442695
        %v1502 = vpow.pop %v1501
        %v1503 = vmul.f32 %v1474, 1.442695
        %v1504 = vpow.pop %v1503
        %v1505 = vmul.f32 %v1475, 1.442695
        %v1506 = vpow.pop %v1505
        %v1507 = vmul.f32 %v1476, 1.442695
        %v1508 = vpow.pop %v1507
        %v1509 = vsel %vm1412, %v1478, 0.0
        %1510 = vadd.xlane.f32.xlu0 %v1509
        %v1511 = vpop.xlane.xlu0 %1510
        %v1512 = vsel %vm1412, %v1480, 0.0
        %1513 = vadd.xlane.f32.xlu0 %v1512
        %v1514 = vpop.xlane.xlu0 %1513
        %v1515 = vsel %vm1412, %v1482, 0.0
        %1516 = vadd.xlane.f32.xlu0 %v1515
        %v1517 = vpop.xlane.xlu0 %1516
        %v1518 = vsel %vm1412, %v1484, 0.0
        %1519 = vadd.xlane.f32.xlu0 %v1518
        %v1520 = vpop.xlane.xlu0 %1519
        %v1521 = vsel %vm1412, %v1486, 0.0
        %1522 = vadd.xlane.f32.xlu0 %v1521
        %v1523 = vpop.xlane.xlu0 %1522
        %v1524 = vsel %vm1412, %v1488, 0.0
        %1525 = vadd.xlane.f32.xlu0 %v1524
        %v1526 = vpop.xlane.xlu0 %1525
        %v1527 = vsel %vm1412, %v1490, 0.0
        %1528 = vadd.xlane.f32.xlu0 %v1527
        %v1529 = vpop.xlane.xlu0 %1528
        %v1530 = vsel %vm1412, %v1492, 0.0
        %1531 = vadd.xlane.f32.xlu0 %v1530
        %v1532 = vpop.xlane.xlu0 %1531
        %v1533 = vsel %vm1412, %v1494, 0.0
        %1534 = vadd.xlane.f32.xlu0 %v1533
        %v1535 = vpop.xlane.xlu0 %1534
        %v1536 = vsel %vm1412, %v1496, 0.0
        %1537 = vadd.xlane.f32.xlu0 %v1536
        %v1538 = vpop.xlane.xlu0 %1537
        %v1539 = vsel %vm1412, %v1498, 0.0
        %1540 = vadd.xlane.f32.xlu0 %v1539
        %v1541 = vpop.xlane.xlu0 %1540
        %v1542 = vsel %vm1412, %v1500, 0.0
        %1543 = vadd.xlane.f32.xlu0 %v1542
        %v1544 = vpop.xlane.xlu0 %1543
        %v1545 = vsel %vm1412, %v1502, 0.0
        %1546 = vadd.xlane.f32.xlu0 %v1545
        %v1547 = vpop.xlane.xlu0 %1546
        %v1548 = vsel %vm1412, %v1504, 0.0
        %1549 = vadd.xlane.f32.xlu0 %v1548
        %v1550 = vpop.xlane.xlu0 %1549
        %v1551 = vsel %vm1412, %v1506, 0.0
        %1552 = vadd.xlane.f32.xlu0 %v1551
        %v1553 = vpop.xlane.xlu0 %1552
        %v1554 = vsel %vm1412, %v1508, 0.0
        %1555 = vadd.xlane.f32.xlu0 %v1554
        %v1556 = vpop.xlane.xlu0 %1555
        %v1557 = vrcp.pop %v1511
        %v1558 = vrcp.pop %v1514
        %v1559 = vrcp.pop %v1517
        %v1560 = vrcp.pop %v1520
        %v1561 = vrcp.pop %v1523
        %v1562 = vrcp.pop %v1526
        %v1563 = vrcp.pop %v1529
        %v1564 = vrcp.pop %v1532
        %v1565 = vrcp.pop %v1535
        %v1566 = vrcp.pop %v1538
        %v1567 = vrcp.pop %v1541
        %v1568 = vrcp.pop %v1544
        %v1569 = vrcp.pop %v1547
        %v1570 = vrcp.pop %v1550
        %v1571 = vrcp.pop %v1553
        %v1572 = vrcp.pop %v1556
        %v1573 = vmul.f32 %v1478, %v1557
        %v1574 = vmul.f32 %v1480, %v1558
        %v1575 = vmul.f32 %v1482, %v1559
        %v1576 = vmul.f32 %v1484, %v1560
        %v1577 = vmul.f32 %v1486, %v1561
        %v1578 = vmul.f32 %v1488, %v1562
        %v1579 = vmul.f32 %v1490, %v1563
        %v1580 = vmul.f32 %v1492, %v1564
        %v1581 = vmul.f32 %v1494, %v1565
        %v1582 = vmul.f32 %v1496, %v1566
        %v1583 = vmul.f32 %v1498, %v1567
        %v1584 = vmul.f32 %v1500, %v1568
        %v1585 = vmul.f32 %v1502, %v1569
        %v1586 = vmul.f32 %v1504, %v1570
        %v1587 = vmul.f32 %v1506, %v1571
        %v1588 = vmul.f32 %v1508, %v1572
        %1589 = vst.msk [vmem:[%s287] sm:$0x3] %vm1412, %v1573
        %1590 = vst.msk [vmem:[%s287 + $0x2] sm:$0x3] %vm1412, %v1574
        %1591 = vst.msk [vmem:[%s287 + $0x4] sm:$0x3] %vm1412, %v1575
        %1592 = vst.msk [vmem:[%s287 + $0x6] sm:$0x3] %vm1412, %v1576
        %1593 = vst.msk [vmem:[%s287 + $0x8] sm:$0x3] %vm1412, %v1577
        %1594 = vst.msk [vmem:[%s287 + $0xa] sm:$0x3] %vm1412, %v1578
        %1595 = vst.msk [vmem:[%s287 + $0xc] sm:$0x3] %vm1412, %v1579
        %1596 = vst.msk [vmem:[%s287 + $0xe] sm:$0x3] %vm1412, %v1580
        %1597 = vst.msk [vmem:[%s287 + $0x10] sm:$0x3] %vm1412, %v1581
        %1598 = vst.msk [vmem:[%s287 + $0x12] sm:$0x3] %vm1412, %v1582
        %1599 = vst.msk [vmem:[%s287 + $0x14] sm:$0x3] %vm1412, %v1583
        %1600 = vst.msk [vmem:[%s287 + $0x16] sm:$0x3] %vm1412, %v1584
        %1601 = vst.msk [vmem:[%s287 + $0x18] sm:$0x3] %vm1412, %v1585
        %1602 = vst.msk [vmem:[%s287 + $0x1a] sm:$0x3] %vm1412, %v1586
        %1603 = vst.msk [vmem:[%s287 + $0x1c] sm:$0x3] %vm1412, %v1587
        %1604 = vst.msk [vmem:[%s287 + $0x1e] sm:$0x3] %vm1412, %v1588
        %v1605 = vpack.c.bf16 %v1573, %v1573
        %v1606 = vpack.c.bf16 %v1574, %v1574
        %v1607 = vpack.c.bf16 %v1575, %v1575
        %v1608 = vpack.c.bf16 %v1576, %v1576
        %v1609 = vpack.c.bf16 %v1577, %v1577
        %v1610 = vpack.c.bf16 %v1578, %v1578
        %v1611 = vpack.c.bf16 %v1579, %v1579
        %v1612 = vpack.c.bf16 %v1580, %v1580
        %v1613 = vpack.c.bf16 %v1581, %v1581
        %v1614 = vpack.c.bf16 %v1582, %v1582
        %v1615 = vpack.c.bf16 %v1583, %v1583
        %v1616 = vpack.c.bf16 %v1584, %v1584
        %v1617 = vpack.c.bf16 %v1585, %v1585
        %v1618 = vpack.c.bf16 %v1586, %v1586
        %v1619 = vpack.c.bf16 %v1587, %v1587
        %v1620 = vpack.c.bf16 %v1588, %v1588
        %vm1621 = vcmask 130048
        %v1623 = vsel %vm1621, %v1605, 0
        %1625 = vmatprep.subr.bf16.mxu0 0
        %1626 = vmatpush1.bf16.msra.mxu0 %v402
        %1627 = vmatprep.subr.bf16.mxu0 0
        %1628 = vmatpush1.bf16.msra.mxu0 0
        %1629 = vmatprep.subr.bf16.mxu0 0
        %1630 = vmatpush1.bf16.msra.mxu0 0
        %1631 = vmatprep.subr.bf16.mxu0 0
        %1632 = vmatpush1.bf16.msra.mxu0 0
        %1633 = vmatprep.subr.bf16.mxu0 0
        %1634 = vmatpush1.bf16.msra.mxu0 0
        %1635 = vmatprep.subr.bf16.mxu0 0
        %1636 = vmatpush1.bf16.msra.mxu0 0
        %1637 = vmatprep.subr.bf16.mxu0 0
        %1638 = vmatpush1.bf16.msra.mxu0 0
        %1639 = vmatprep.subr.bf16.mxu0 0
        %1640 = vmatpush1.bf16.msra.mxu0 0
        %1641 = vmatprep.subr.bf16.mxu0 0
        %1642 = vmatpush1.bf16.msra.mxu0 0
        %1643 = vmatprep.subr.bf16.mxu0 0
        %1644 = vmatpush1.bf16.msra.mxu0 0
        %1645 = vmatprep.subr.bf16.mxu0 0
        %1646 = vmatpush1.bf16.msra.mxu0 0
        %1647 = vmatprep.subr.bf16.mxu0 0
        %1648 = vmatpush1.bf16.msra.mxu0 0
        %1649 = vmatprep.subr.bf16.mxu0 0
        %1650 = vmatpush1.bf16.msra.mxu0 0
        %1651 = vmatprep.subr.bf16.mxu0 0
        %1652 = vmatpush1.bf16.msra.mxu0 0
        %1653 = vmatprep.subr.bf16.mxu0 0
        %1654 = vmatpush1.bf16.msra.mxu0 0
        %1655 = vmatprep.subr.bf16.mxu0 0
        %1656 = vmatpush1.bf16.msra.mxu0 0
        %1657 = vmatprep.mubr.bf16.mxu0 0
        %1658 = vmatmul.mubr.bf16.gmra.mrb[0].mxu0 %v1623
        %v1659 = vpop.f32.mrb[0].mxu0
        %v1660 = vadd.f32 0.0, %v1659
        %v1661 = vpop.f32.mrb[0].mxu0
        %v1662 = vpop.f32.mrb[0].mxu0
        %v1663 = vpop.f32.mrb[0].mxu0
        %1664 = vdwg.mxu0
        %v1666 = vsel %vm1621, %v1606, 0
        %1668 = vmatprep.subr.bf16.mxu0 0
        %1669 = vmatpush1.bf16.msra.mxu0 %v403
        %1670 = vmatprep.subr.bf16.mxu0 0
        %1671 = vmatpush1.bf16.msra.mxu0 0
        %1672 = vmatprep.subr.bf16.mxu0 0
        %1673 = vmatpush1.bf16.msra.mxu0 0
        %1674 = vmatprep.subr.bf16.mxu0 0
        %1675 = vmatpush1.bf16.msra.mxu0 0
        %1676 = vmatprep.subr.bf16.mxu0 0
        %1677 = vmatpush1.bf16.msra.mxu0 0
        %1678 = vmatprep.subr.bf16.mxu0 0
        %1679 = vmatpush1.bf16.msra.mxu0 0
        %1680 = vmatprep.subr.bf16.mxu0 0
        %1681 = vmatpush1.bf16.msra.mxu0 0
        %1682 = vmatprep.subr.bf16.mxu0 0
        %1683 = vmatpush1.bf16.msra.mxu0 0
        %1684 = vmatprep.subr.bf16.mxu0 0
        %1685 = vmatpush1.bf16.msra.mxu0 0
        %1686 = vmatprep.subr.bf16.mxu0 0
        %1687 = vmatpush1.bf16.msra.mxu0 0
        %1688 = vmatprep.subr.bf16.mxu0 0
        %1689 = vmatpush1.bf16.msra.mxu0 0
        %1690 = vmatprep.subr.bf16.mxu0 0
        %1691 = vmatpush1.bf16.msra.mxu0 0
        %1692 = vmatprep.subr.bf16.mxu0 0
        %1693 = vmatpush1.bf16.msra.mxu0 0
        %1694 = vmatprep.subr.bf16.mxu0 0
        %1695 = vmatpush1.bf16.msra.mxu0 0
        %1696 = vmatprep.subr.bf16.mxu0 0
        %1697 = vmatpush1.bf16.msra.mxu0 0
        %1698 = vmatprep.subr.bf16.mxu0 0
        %1699 = vmatpush1.bf16.msra.mxu0 0
        %1700 = vmatprep.mubr.bf16.mxu0 0
        %1701 = vmatmul.mubr.bf16.gmra.mrb[0].mxu0 %v1666
        %v1702 = vpop.f32.mrb[0].mxu0
        %v1703 = vadd.f32 0.0, %v1702
        %v1704 = vpop.f32.mrb[0].mxu0
        %v1705 = vpop.f32.mrb[0].mxu0
        %v1706 = vpop.f32.mrb[0].mxu0
        %1707 = vdwg.mxu0
        %v1709 = vsel %vm1621, %v1607, 0
        %1711 = vmatprep.subr.bf16.mxu0 0
        %1712 = vmatpush1.bf16.msra.mxu0 %v404
        %1713 = vmatprep.subr.bf16.mxu0 0
        %1714 = vmatpush1.bf16.msra.mxu0 0
        %1715 = vmatprep.subr.bf16.mxu0 0
        %1716 = vmatpush1.bf16.msra.mxu0 0
        %1717 = vmatprep.subr.bf16.mxu0 0
        %1718 = vmatpush1.bf16.msra.mxu0 0
        %1719 = vmatprep.subr.bf16.mxu0 0
        %1720 = vmatpush1.bf16.msra.mxu0 0
        %1721 = vmatprep.subr.bf16.mxu0 0
        %1722 = vmatpush1.bf16.msra.mxu0 0
        %1723 = vmatprep.subr.bf16.mxu0 0
        %1724 = vmatpush1.bf16.msra.mxu0 0
        %1725 = vmatprep.subr.bf16.mxu0 0
        %1726 = vmatpush1.bf16.msra.mxu0 0
        %1727 = vmatprep.subr.bf16.mxu0 0
        %1728 = vmatpush1.bf16.msra.mxu0 0
        %1729 = vmatprep.subr.bf16.mxu0 0
        %1730 = vmatpush1.bf16.msra.mxu0 0
        %1731 = vmatprep.subr.bf16.mxu0 0
        %1732 = vmatpush1.bf16.msra.mxu0 0
        %1733 = vmatprep.subr.bf16.mxu0 0
        %1734 = vmatpush1.bf16.msra.mxu0 0
        %1735 = vmatprep.subr.bf16.mxu0 0
        %1736 = vmatpush1.bf16.msra.mxu0 0
        %1737 = vmatprep.subr.bf16.mxu0 0
        %1738 = vmatpush1.bf16.msra.mxu0 0
        %1739 = vmatprep.subr.bf16.mxu0 0
        %1740 = vmatpush1.bf16.msra.mxu0 0
        %1741 = vmatprep.subr.bf16.mxu0 0
        %1742 = vmatpush1.bf16.msra.mxu0 0
        %1743 = vmatprep.mubr.bf16.mxu0 0
        %1744 = vmatmul.mubr.bf16.gmra.mrb[0].mxu0 %v1709
        %v1745 = vpop.f32.mrb[0].mxu0
        %v1746 = vadd.f32 0.0, %v1745
        %v1747 = vpop.f32.mrb[0].mxu0
        %v1748 = vpop.f32.mrb[0].mxu0
        %v1749 = vpop.f32.mrb[0].mxu0
        %1750 = vdwg.mxu0
        %v1752 = vsel %vm1621, %v1608, 0
        %1754 = vmatprep.subr.bf16.mxu0 0
        %1755 = vmatpush1.bf16.msra.mxu0 %v405
        %1756 = vmatprep.subr.bf16.mxu0 0
        %1757 = vmatpush1.bf16.msra.mxu0 0
        %1758 = vmatprep.subr.bf16.mxu0 0
        %1759 = vmatpush1.bf16.msra.mxu0 0
        %1760 = vmatprep.subr.bf16.mxu0 0
        %1761 = vmatpush1.bf16.msra.mxu0 0
        %1762 = vmatprep.subr.bf16.mxu0 0
        %1763 = vmatpush1.bf16.msra.mxu0 0
        %1764 = vmatprep.subr.bf16.mxu0 0
        %1765 = vmatpush1.bf16.msra.mxu0 0
        %1766 = vmatprep.subr.bf16.mxu0 0
        %1767 = vmatpush1.bf16.msra.mxu0 0
        %1768 = vmatprep.subr.bf16.mxu0 0
        %1769 = vmatpush1.bf16.msra.mxu0 0
        %1770 = vmatprep.subr.bf16.mxu0 0
        %1771 = vmatpush1.bf16.msra.mxu0 0
        %1772 = vmatprep.subr.bf16.mxu0 0
        %1773 = vmatpush1.bf16.msra.mxu0 0
        %1774 = vmatprep.subr.bf16.mxu0 0
        %1775 = vmatpush1.bf16.msra.mxu0 0
        %1776 = vmatprep.subr.bf16.mxu0 0
        %1777 = vmatpush1.bf16.msra.mxu0 0
        %1778 = vmatprep.subr.bf16.mxu0 0
        %1779 = vmatpush1.bf16.msra.mxu0 0
        %1780 = vmatprep.subr.bf16.mxu0 0
        %1781 = vmatpush1.bf16.msra.mxu0 0
        %1782 = vmatprep.subr.bf16.mxu0 0
        %1783 = vmatpush1.bf16.msra.mxu0 0
        %1784 = vmatprep.subr.bf16.mxu0 0
        %1785 = vmatpush1.bf16.msra.mxu0 0
        %1786 = vmatprep.mubr.bf16.mxu0 0
        %1787 = vmatmul.mubr.bf16.gmra.mrb[0].mxu0 %v1752
        %v1788 = vpop.f32.mrb[0].mxu0
        %v1789 = vadd.f32 0.0, %v1788
        %v1790 = vpop.f32.mrb[0].mxu0
        %v1791 = vpop.f32.mrb[0].mxu0
        %v1792 = vpop.f32.mrb[0].mxu0
        %1793 = vdwg.mxu0
        %v1795 = vsel %vm1621, %v1609, 0
        %1797 = vmatprep.subr.bf16.mxu0 0
        %1798 = vmatpush1.bf16.msra.mxu0 %v406
        %1799 = vmatprep.subr.bf16.mxu0 0
        %1800 = vmatpush1.bf16.msra.mxu0 0
        %1801 = vmatprep.subr.bf16.mxu0 0
        %1802 = vmatpush1.bf16.msra.mxu0 0
        %1803 = vmatprep.subr.bf16.mxu0 0
        %1804 = vmatpush1.bf16.msra.mxu0 0
        %1805 = vmatprep.subr.bf16.mxu0 0
        %1806 = vmatpush1.bf16.msra.mxu0 0
        %1807 = vmatprep.subr.bf16.mxu0 0
        %1808 = vmatpush1.bf16.msra.mxu0 0
        %1809 = vmatprep.subr.bf16.mxu0 0
        %1810 = vmatpush1.bf16.msra.mxu0 0
        %1811 = vmatprep.subr.bf16.mxu0 0
        %1812 = vmatpush1.bf16.msra.mxu0 0
        %1813 = vmatprep.subr.bf16.mxu0 0
        %1814 = vmatpush1.bf16.msra.mxu0 0
        %1815 = vmatprep.subr.bf16.mxu0 0
        %1816 = vmatpush1.bf16.msra.mxu0 0
        %1817 = vmatprep.subr.bf16.mxu0 0
        %1818 = vmatpush1.bf16.msra.mxu0 0
        %1819 = vmatprep.subr.bf16.mxu0 0
        %1820 = vmatpush1.bf16.msra.mxu0 0
        %1821 = vmatprep.subr.bf16.mxu0 0
        %1822 = vmatpush1.bf16.msra.mxu0 0
        %1823 = vmatprep.subr.bf16.mxu0 0
        %1824 = vmatpush1.bf16.msra.mxu0 0
        %1825 = vmatprep.subr.bf16.mxu0 0
        %1826 = vmatpush1.bf16.msra.mxu0 0
        %1827 = vmatprep.subr.bf16.mxu0 0
        %1828 = vmatpush1.bf16.msra.mxu0 0
        %1829 = vmatprep.mubr.bf16.mxu0 0
        %1830 = vmatmul.mubr.bf16.gmra.mrb[0].mxu0 %v1795
        %v1831 = vpop.f32.mrb[0].mxu0
        %v1832 = vadd.f32 0.0, %v1831
        %v1833 = vpop.f32.mrb[0].mxu0
        %v1834 = vpop.f32.mrb[0].mxu0
        %v1835 = vpop.f32.mrb[0].mxu0
        %1836 = vdwg.mxu0
        %v1838 = vsel %vm1621, %v1610, 0
        %1840 = vmatprep.subr.bf16.mxu0 0
        %1841 = vmatpush1.bf16.msra.mxu0 %v407
        %1842 = vmatprep.subr.bf16.mxu0 0
        %1843 = vmatpush1.bf16.msra.mxu0 0
        %1844 = vmatprep.subr.bf16.mxu0 0
        %1845 = vmatpush1.bf16.msra.mxu0 0
        %1846 = vmatprep.subr.bf16.mxu0 0
        %1847 = vmatpush1.bf16.msra.mxu0 0
        %1848 = vmatprep.subr.bf16.mxu0 0
        %1849 = vmatpush1.bf16.msra.mxu0 0
        %1850 = vmatprep.subr.bf16.mxu0 0
        %1851 = vmatpush1.bf16.msra.mxu0 0
        %1852 = vmatprep.subr.bf16.mxu0 0
        %1853 = vmatpush1.bf16.msra.mxu0 0
        %1854 = vmatprep.subr.bf16.mxu0 0
        %1855 = vmatpush1.bf16.msra.mxu0 0
        %1856 = vmatprep.subr.bf16.mxu0 0
        %1857 = vmatpush1.bf16.msra.mxu0 0
        %1858 = vmatprep.subr.bf16.mxu0 0
        %1859 = vmatpush1.bf16.msra.mxu0 0
        %1860 = vmatprep.subr.bf16.mxu0 0
        %1861 = vmatpush1.bf16.msra.mxu0 0
        %1862 = vmatprep.subr.bf16.mxu0 0
        %1863 = vmatpush1.bf16.msra.mxu0 0
        %1864 = vmatprep.subr.bf16.mxu0 0
        %1865 = vmatpush1.bf16.msra.mxu0 0
        %1866 = vmatprep.subr.bf16.mxu0 0
        %1867 = vmatpush1.bf16.msra.mxu0 0
        %1868 = vmatprep.subr.bf16.mxu0 0
        %1869 = vmatpush1.bf16.msra.mxu0 0
        %1870 = vmatprep.subr.bf16.mxu0 0
        %1871 = vmatpush1.bf16.msra.mxu0 0
        %1872 = vmatprep.mubr.bf16.mxu0 0
        %1873 = vmatmul.mubr.bf16.gmra.mrb[0].mxu0 %v1838
        %v1874 = vpop.f32.mrb[0].mxu0
        %v1875 = vadd.f32 0.0, %v1874
        %v1876 = vpop.f32.mrb[0].mxu0
        %v1877 = vpop.f32.mrb[0].mxu0
        %v1878 = vpop.f32.mrb[0].mxu0
        %1879 = vdwg.mxu0
        %v1881 = vsel %vm1621, %v1611, 0
        %1883 = vmatprep.subr.bf16.mxu0 0
        %1884 = vmatpush1.bf16.msra.mxu0 %v408
        %1885 = vmatprep.subr.bf16.mxu0 0
        %1886 = vmatpush1.bf16.msra.mxu0 0
        %1887 = vmatprep.subr.bf16.mxu0 0
        %1888 = vmatpush1.bf16.msra.mxu0 0
        %1889 = vmatprep.subr.bf16.mxu0 0
        %1890 = vmatpush1.bf16.msra.mxu0 0
        %1891 = vmatprep.subr.bf16.mxu0 0
        %1892 = vmatpush1.bf16.msra.mxu0 0
        %1893 = vmatprep.subr.bf16.mxu0 0
        %1894 = vmatpush1.bf16.msra.mxu0 0
        %1895 = vmatprep.subr.bf16.mxu0 0
        %1896 = vmatpush1.bf16.msra.mxu0 0
        %1897 = vmatprep.subr.bf16.mxu0 0
        %1898 = vmatpush1.bf16.msra.mxu0 0
        %1899 = vmatprep.subr.bf16.mxu0 0
        %1900 = vmatpush1.bf16.msra.mxu0 0
        %1901 = vmatprep.subr.bf16.mxu0 0
        %1902 = vmatpush1.bf16.msra.mxu0 0
        %1903 = vmatprep.subr.bf16.mxu0 0
        %1904 = vmatpush1.bf16.msra.mxu0 0
        %1905 = vmatprep.subr.bf16.mxu0 0
        %1906 = vmatpush1.bf16.msra.mxu0 0
        %1907 = vmatprep.subr.bf16.mxu0 0
        %1908 = vmatpush1.bf16.msra.mxu0 0
        %1909 = vmatprep.subr.bf16.mxu0 0
        %1910 = vmatpush1.bf16.msra.mxu0 0
        %1911 = vmatprep.subr.bf16.mxu0 0
        %1912 = vmatpush1.bf16.msra.mxu0 0
        %1913 = vmatprep.subr.bf16.mxu0 0
        %1914 = vmatpush1.bf16.msra.mxu0 0
        %1915 = vmatprep.mubr.bf16.mxu0 0
        %1916 = vmatmul.mubr.bf16.gmra.mrb[0].mxu0 %v1881
        %v1917 = vpop.f32.mrb[0].mxu0
        %v1918 = vadd.f32 0.0, %v1917
        %v1919 = vpop.f32.mrb[0].mxu0
        %v1920 = vpop.f32.mrb[0].mxu0
        %v1921 = vpop.f32.mrb[0].mxu0
        %1922 = vdwg.mxu0
        %v1924 = vsel %vm1621, %v1612, 0
        %1926 = vmatprep.subr.bf16.mxu0 0
        %1927 = vmatpush1.bf16.msra.mxu0 %v409
        %1928 = vmatprep.subr.bf16.mxu0 0
        %1929 = vmatpush1.bf16.msra.mxu0 0
        %1930 = vmatprep.subr.bf16.mxu0 0
        %1931 = vmatpush1.bf16.msra.mxu0 0
        %1932 = vmatprep.subr.bf16.mxu0 0
        %1933 = vmatpush1.bf16.msra.mxu0 0
        %1934 = vmatprep.subr.bf16.mxu0 0
        %1935 = vmatpush1.bf16.msra.mxu0 0
        %1936 = vmatprep.subr.bf16.mxu0 0
        %1937 = vmatpush1.bf16.msra.mxu0 0
        %1938 = vmatprep.subr.bf16.mxu0 0
        %1939 = vmatpush1.bf16.msra.mxu0 0
        %1940 = vmatprep.subr.bf16.mxu0 0
        %1941 = vmatpush1.bf16.msra.mxu0 0
        %1942 = vmatprep.subr.bf16.mxu0 0
        %1943 = vmatpush1.bf16.msra.mxu0 0
        %1944 = vmatprep.subr.bf16.mxu0 0
        %1945 = vmatpush1.bf16.msra.mxu0 0
        %1946 = vmatprep.subr.bf16.mxu0 0
        %1947 = vmatpush1.bf16.msra.mxu0 0
        %1948 = vmatprep.subr.bf16.mxu0 0
        %1949 = vmatpush1.bf16.msra.mxu0 0
        %1950 = vmatprep.subr.bf16.mxu0 0
        %1951 = vmatpush1.bf16.msra.mxu0 0
        %1952 = vmatprep.subr.bf16.mxu0 0
        %1953 = vmatpush1.bf16.msra.mxu0 0
        %1954 = vmatprep.subr.bf16.mxu0 0
        %1955 = vmatpush1.bf16.msra.mxu0 0
        %1956 = vmatprep.subr.bf16.mxu0 0
        %1957 = vmatpush1.bf16.msra.mxu0 0
        %1958 = vmatprep.mubr.bf16.mxu0 0
        %1959 = vmatmul.mubr.bf16.gmra.mrb[0].mxu0 %v1924
        %v1960 = vpop.f32.mrb[0].mxu0
        %v1961 = vadd.f32 0.0, %v1960
        %v1962 = vpop.f32.mrb[0].mxu0
        %v1963 = vpop.f32.mrb[0].mxu0
        %v1964 = vpop.f32.mrb[0].mxu0
        %1965 = vdwg.mxu0
        %v1967 = vsel %vm1621, %v1613, 0
        %1969 = vmatprep.subr.bf16.mxu0 0
        %1970 = vmatpush1.bf16.msra.mxu0 %v410
        %1971 = vmatprep.subr.bf16.mxu0 0
        %1972 = vmatpush1.bf16.msra.mxu0 0
        %1973 = vmatprep.subr.bf16.mxu0 0
        %1974 = vmatpush1.bf16.msra.mxu0 0
        %1975 = vmatprep.subr.bf16.mxu0 0
        %1976 = vmatpush1.bf16.msra.mxu0 0
        %1977 = vmatprep.subr.bf16.mxu0 0
        %1978 = vmatpush1.bf16.msra.mxu0 0
        %1979 = vmatprep.subr.bf16.mxu0 0
        %1980 = vmatpush1.bf16.msra.mxu0 0
        %1981 = vmatprep.subr.bf16.mxu0 0
        %1982 = vmatpush1.bf16.msra.mxu0 0
        %1983 = vmatprep.subr.bf16.mxu0 0
        %1984 = vmatpush1.bf16.msra.mxu0 0
        %1985 = vmatprep.subr.bf16.mxu0 0
        %1986 = vmatpush1.bf16.msra.mxu0 0
        %1987 = vmatprep.subr.bf16.mxu0 0
        %1988 = vmatpush1.bf16.msra.mxu0 0
        %1989 = vmatprep.subr.bf16.mxu0 0
        %1990 = vmatpush1.bf16.msra.mxu0 0
        %1991 = vmatprep.subr.bf16.mxu0 0
        %1992 = vmatpush1.bf16.msra.mxu0 0
        %1993 = vmatprep.subr.bf16.mxu0 0
        %1994 = vmatpush1.bf16.msra.mxu0 0
        %1995 = vmatprep.subr.bf16.mxu0 0
        %1996 = vmatpush1.bf16.msra.mxu0 0
        %1997 = vmatprep.subr.bf16.mxu0 0
        %1998 = vmatpush1.bf16.msra.mxu0 0
        %1999 = vmatprep.subr.bf16.mxu0 0
        %2000 = vmatpush1.bf16.msra.mxu0 0
        %2001 = vmatprep.mubr.bf16.mxu0 0
        %2002 = vmatmul.mubr.bf16.gmra.mrb[0].mxu0 %v1967
        %v2003 = vpop.f32.mrb[0].mxu0
        %v2004 = vadd.f32 0.0, %v2003
        %v2005 = vpop.f32.mrb[0].mxu0
        %v2006 = vpop.f32.mrb[0].mxu0
        %v2007 = vpop.f32.mrb[0].mxu0
        %2008 = vdwg.mxu0
        %v2010 = vsel %vm1621, %v1614, 0
        %2012 = vmatprep.subr.bf16.mxu0 0
        %2013 = vmatpush1.bf16.msra.mxu0 %v411
        %2014 = vmatprep.subr.bf16.mxu0 0
        %2015 = vmatpush1.bf16.msra.mxu0 0
        %2016 = vmatprep.subr.bf16.mxu0 0
        %2017 = vmatpush1.bf16.msra.mxu0 0
        %2018 = vmatprep.subr.bf16.mxu0 0
        %2019 = vmatpush1.bf16.msra.mxu0 0
        %2020 = vmatprep.subr.bf16.mxu0 0
        %2021 = vmatpush1.bf16.msra.mxu0 0
        %2022 = vmatprep.subr.bf16.mxu0 0
        %2023 = vmatpush1.bf16.msra.mxu0 0
        %2024 = vmatprep.subr.bf16.mxu0 0
        %2025 = vmatpush1.bf16.msra.mxu0 0
        %2026 = vmatprep.subr.bf16.mxu0 0
        %2027 = vmatpush1.bf16.msra.mxu0 0
        %2028 = vmatprep.subr.bf16.mxu0 0
        %2029 = vmatpush1.bf16.msra.mxu0 0
        %2030 = vmatprep.subr.bf16.mxu0 0
        %2031 = vmatpush1.bf16.msra.mxu0 0
        %2032 = vmatprep.subr.bf16.mxu0 0
        %2033 = vmatpush1.bf16.msra.mxu0 0
        %2034 = vmatprep.subr.bf16.mxu0 0
        %2035 = vmatpush1.bf16.msra.mxu0 0
        %2036 = vmatprep.subr.bf16.mxu0 0
        %2037 = vmatpush1.bf16.msra.mxu0 0
        %2038 = vmatprep.subr.bf16.mxu0 0
        %2039 = vmatpush1.bf16.msra.mxu0 0
        %2040 = vmatprep.subr.bf16.mxu0 0
        %2041 = vmatpush1.bf16.msra.mxu0 0
        %2042 = vmatprep.subr.bf16.mxu0 0
        %2043 = vmatpush1.bf16.msra.mxu0 0
        %2044 = vmatprep.mubr.bf16.mxu0 0
        %2045 = vmatmul.mubr.bf16.gmra.mrb[0].mxu0 %v2010
        %v2046 = vpop.f32.mrb[0].mxu0
        %v2047 = vadd.f32 0.0, %v2046
        %v2048 = vpop.f32.mrb[0].mxu0
        %v2049 = vpop.f32.mrb[0].mxu0
        %v2050 = vpop.f32.mrb[0].mxu0
        %2051 = vdwg.mxu0
        %v2053 = vsel %vm1621, %v1615, 0
        %2055 = vmatprep.subr.bf16.mxu0 0
        %2056 = vmatpush1.bf16.msra.mxu0 %v412
        %2057 = vmatprep.subr.bf16.mxu0 0
        %2058 = vmatpush1.bf16.msra.mxu0 0
        %2059 = vmatprep.subr.bf16.mxu0 0
        %2060 = vmatpush1.bf16.msra.mxu0 0
        %2061 = vmatprep.subr.bf16.mxu0 0
        %2062 = vmatpush1.bf16.msra.mxu0 0
        %2063 = vmatprep.subr.bf16.mxu0 0
        %2064 = vmatpush1.bf16.msra.mxu0 0
        %2065 = vmatprep.subr.bf16.mxu0 0
        %2066 = vmatpush1.bf16.msra.mxu0 0
        %2067 = vmatprep.subr.bf16.mxu0 0
        %2068 = vmatpush1.bf16.msra.mxu0 0
        %2069 = vmatprep.subr.bf16.mxu0 0
        %2070 = vmatpush1.bf16.msra.mxu0 0
        %2071 = vmatprep.subr.bf16.mxu0 0
        %2072 = vmatpush1.bf16.msra.mxu0 0
        %2073 = vmatprep.subr.bf16.mxu0 0
        %2074 = vmatpush1.bf16.msra.mxu0 0
        %2075 = vmatprep.subr.bf16.mxu0 0
        %2076 = vmatpush1.bf16.msra.mxu0 0
        %2077 = vmatprep.subr.bf16.mxu0 0
        %2078 = vmatpush1.bf16.msra.mxu0 0
        %2079 = vmatprep.subr.bf16.mxu0 0
        %2080 = vmatpush1.bf16.msra.mxu0 0
        %2081 = vmatprep.subr.bf16.mxu0 0
        %2082 = vmatpush1.bf16.msra.mxu0 0
        %2083 = vmatprep.subr.bf16.mxu0 0
        %2084 = vmatpush1.bf16.msra.mxu0 0
        %2085 = vmatprep.subr.bf16.mxu0 0
        %2086 = vmatpush1.bf16.msra.mxu0 0
        %2087 = vmatprep.mubr.bf16.mxu0 0
        %2088 = vmatmul.mubr.bf16.gmra.mrb[0].mxu0 %v2053
        %v2089 = vpop.f32.mrb[0].mxu0
        %v2090 = vadd.f32 0.0, %v2089
        %v2091 = vpop.f32.mrb[0].mxu0
        %v2092 = vpop.f32.mrb[0].mxu0
        %v2093 = vpop.f32.mrb[0].mxu0
        %2094 = vdwg.mxu0
        %v2096 = vsel %vm1621, %v1616, 0
        %2098 = vmatprep.subr.bf16.mxu0 0
        %2099 = vmatpush1.bf16.msra.mxu0 %v413
        %2100 = vmatprep.subr.bf16.mxu0 0
        %2101 = vmatpush1.bf16.msra.mxu0 0
        %2102 = vmatprep.subr.bf16.mxu0 0
        %2103 = vmatpush1.bf16.msra.mxu0 0
        %2104 = vmatprep.subr.bf16.mxu0 0
        %2105 = vmatpush1.bf16.msra.mxu0 0
        %2106 = vmatprep.subr.bf16.mxu0 0
        %2107 = vmatpush1.bf16.msra.mxu0 0
        %2108 = vmatprep.subr.bf16.mxu0 0
        %2109 = vmatpush1.bf16.msra.mxu0 0
        %2110 = vmatprep.subr.bf16.mxu0 0
        %2111 = vmatpush1.bf16.msra.mxu0 0
        %2112 = vmatprep.subr.bf16.mxu0 0
        %2113 = vmatpush1.bf16.msra.mxu0 0
        %2114 = vmatprep.subr.bf16.mxu0 0
        %2115 = vmatpush1.bf16.msra.mxu0 0
        %2116 = vmatprep.subr.bf16.mxu0 0
        %2117 = vmatpush1.bf16.msra.mxu0 0
        %2118 = vmatprep.subr.bf16.mxu0 0
        %2119 = vmatpush1.bf16.msra.mxu0 0
        %2120 = vmatprep.subr.bf16.mxu0 0
        %2121 = vmatpush1.bf16.msra.mxu0 0
        %2122 = vmatprep.subr.bf16.mxu0 0
        %2123 = vmatpush1.bf16.msra.mxu0 0
        %2124 = vmatprep.subr.bf16.mxu0 0
        %2125 = vmatpush1.bf16.msra.mxu0 0
        %2126 = vmatprep.subr.bf16.mxu0 0
        %2127 = vmatpush1.bf16.msra.mxu0 0
        %2128 = vmatprep.subr.bf16.mxu0 0
        %2129 = vmatpush1.bf16.msra.mxu0 0
        %2130 = vmatprep.mubr.bf16.mxu0 0
        %2131 = vmatmul.mubr.bf16.gmra.mrb[0].mxu0 %v2096
        %v2132 = vpop.f32.mrb[0].mxu0
        %v2133 = vadd.f32 0.0, %v2132
        %v2134 = vpop.f32.mrb[0].mxu0
        %v2135 = vpop.f32.mrb[0].mxu0
        %v2136 = vpop.f32.mrb[0].mxu0
        %2137 = vdwg.mxu0
        %v2139 = vsel %vm1621, %v1617, 0
        %2141 = vmatprep.subr.bf16.mxu0 0
        %2142 = vmatpush1.bf16.msra.mxu0 %v414
        %2143 = vmatprep.subr.bf16.mxu0 0
        %2144 = vmatpush1.bf16.msra.mxu0 0
        %2145 = vmatprep.subr.bf16.mxu0 0
        %2146 = vmatpush1.bf16.msra.mxu0 0
        %2147 = vmatprep.subr.bf16.mxu0 0
        %2148 = vmatpush1.bf16.msra.mxu0 0
        %2149 = vmatprep.subr.bf16.mxu0 0
        %2150 = vmatpush1.bf16.msra.mxu0 0
        %2151 = vmatprep.subr.bf16.mxu0 0
        %2152 = vmatpush1.bf16.msra.mxu0 0
        %2153 = vmatprep.subr.bf16.mxu0 0
        %2154 = vmatpush1.bf16.msra.mxu0 0
        %2155 = vmatprep.subr.bf16.mxu0 0
        %2156 = vmatpush1.bf16.msra.mxu0 0
        %2157 = vmatprep.subr.bf16.mxu0 0
        %2158 = vmatpush1.bf16.msra.mxu0 0
        %2159 = vmatprep.subr.bf16.mxu0 0
        %2160 = vmatpush1.bf16.msra.mxu0 0
        %2161 = vmatprep.subr.bf16.mxu0 0
        %2162 = vmatpush1.bf16.msra.mxu0 0
        %2163 = vmatprep.subr.bf16.mxu0 0
        %2164 = vmatpush1.bf16.msra.mxu0 0
        %2165 = vmatprep.subr.bf16.mxu0 0
        %2166 = vmatpush1.bf16.msra.mxu0 0
        %2167 = vmatprep.subr.bf16.mxu0 0
        %2168 = vmatpush1.bf16.msra.mxu0 0
        %2169 = vmatprep.subr.bf16.mxu0 0
        %2170 = vmatpush1.bf16.msra.mxu0 0
        %2171 = vmatprep.subr.bf16.mxu0 0
        %2172 = vmatpush1.bf16.msra.mxu0 0
        %2173 = vmatprep.mubr.bf16.mxu0 0
        %2174 = vmatmul.mubr.bf16.gmra.mrb[0].mxu0 %v2139
        %v2175 = vpop.f32.mrb[0].mxu0
        %v2176 = vadd.f32 0.0, %v2175
        %v2177 = vpop.f32.mrb[0].mxu0
        %v2178 = vpop.f32.mrb[0].mxu0
        %v2179 = vpop.f32.mrb[0].mxu0
        %2180 = vdwg.mxu0
        %v2182 = vsel %vm1621, %v1618, 0
        %2184 = vmatprep.subr.bf16.mxu0 0
        %2185 = vmatpush1.bf16.msra.mxu0 %v415
        %2186 = vmatprep.subr.bf16.mxu0 0
        %2187 = vmatpush1.bf16.msra.mxu0 0
        %2188 = vmatprep.subr.bf16.mxu0 0
        %2189 = vmatpush1.bf16.msra.mxu0 0
        %2190 = vmatprep.subr.bf16.mxu0 0
        %2191 = vmatpush1.bf16.msra.mxu0 0
        %2192 = vmatprep.subr.bf16.mxu0 0
        %2193 = vmatpush1.bf16.msra.mxu0 0
        %2194 = vmatprep.subr.bf16.mxu0 0
        %2195 = vmatpush1.bf16.msra.mxu0 0
        %2196 = vmatprep.subr.bf16.mxu0 0
        %2197 = vmatpush1.bf16.msra.mxu0 0
        %2198 = vmatprep.subr.bf16.mxu0 0
        %2199 = vmatpush1.bf16.msra.mxu0 0
        %2200 = vmatprep.subr.bf16.mxu0 0
        %2201 = vmatpush1.bf16.msra.mxu0 0
        %2202 = vmatprep.subr.bf16.mxu0 0
        %2203 = vmatpush1.bf16.msra.mxu0 0
        %2204 = vmatprep.subr.bf16.mxu0 0
        %2205 = vmatpush1.bf16.msra.mxu0 0
        %2206 = vmatprep.subr.bf16.mxu0 0
        %2207 = vmatpush1.bf16.msra.mxu0 0
        %2208 = vmatprep.subr.bf16.mxu0 0
        %2209 = vmatpush1.bf16.msra.mxu0 0
        %2210 = vmatprep.subr.bf16.mxu0 0
        %2211 = vmatpush1.bf16.msra.mxu0 0
        %2212 = vmatprep.subr.bf16.mxu0 0
        %2213 = vmatpush1.bf16.msra.mxu0 0
        %2214 = vmatprep.subr.bf16.mxu0 0
        %2215 = vmatpush1.bf16.msra.mxu0 0
        %2216 = vmatprep.mubr.bf16.mxu0 0
        %2217 = vmatmul.mubr.bf16.gmra.mrb[0].mxu0 %v2182
        %v2218 = vpop.f32.mrb[0].mxu0
        %v2219 = vadd.f32 0.0, %v2218
        %v2220 = vpop.f32.mrb[0].mxu0
        %v2221 = vpop.f32.mrb[0].mxu0
        %v2222 = vpop.f32.mrb[0].mxu0
        %2223 = vdwg.mxu0
        %v2225 = vsel %vm1621, %v1619, 0
        %2227 = vmatprep.subr.bf16.mxu0 0
        %2228 = vmatpush1.bf16.msra.mxu0 %v416
        %2229 = vmatprep.subr.bf16.mxu0 0
        %2230 = vmatpush1.bf16.msra.mxu0 0
        %2231 = vmatprep.subr.bf16.mxu0 0
        %2232 = vmatpush1.bf16.msra.mxu0 0
        %2233 = vmatprep.subr.bf16.mxu0 0
        %2234 = vmatpush1.bf16.msra.mxu0 0
        %2235 = vmatprep.subr.bf16.mxu0 0
        %2236 = vmatpush1.bf16.msra.mxu0 0
        %2237 = vmatprep.subr.bf16.mxu0 0
        %2238 = vmatpush1.bf16.msra.mxu0 0
        %2239 = vmatprep.subr.bf16.mxu0 0
        %2240 = vmatpush1.bf16.msra.mxu0 0
        %2241 = vmatprep.subr.bf16.mxu0 0
        %2242 = vmatpush1.bf16.msra.mxu0 0
        %2243 = vmatprep.subr.bf16.mxu0 0
        %2244 = vmatpush1.bf16.msra.mxu0 0
        %2245 = vmatprep.subr.bf16.mxu0 0
        %2246 = vmatpush1.bf16.msra.mxu0 0
        %2247 = vmatprep.subr.bf16.mxu0 0
        %2248 = vmatpush1.bf16.msra.mxu0 0
        %2249 = vmatprep.subr.bf16.mxu0 0
        %2250 = vmatpush1.bf16.msra.mxu0 0
        %2251 = vmatprep.subr.bf16.mxu0 0
        %2252 = vmatpush1.bf16.msra.mxu0 0
        %2253 = vmatprep.subr.bf16.mxu0 0
        %2254 = vmatpush1.bf16.msra.mxu0 0
        %2255 = vmatprep.subr.bf16.mxu0 0
        %2256 = vmatpush1.bf16.msra.mxu0 0
        %2257 = vmatprep.subr.bf16.mxu0 0
        %2258 = vmatpush1.bf16.msra.mxu0 0
        %2259 = vmatprep.mubr.bf16.mxu0 0
        %2260 = vmatmul.mubr.bf16.gmra.mrb[0].mxu0 %v2225
        %v2261 = vpop.f32.mrb[0].mxu0
        %v2262 = vadd.f32 0.0, %v2261
        %v2263 = vpop.f32.mrb[0].mxu0
        %v2264 = vpop.f32.mrb[0].mxu0
        %v2265 = vpop.f32.mrb[0].mxu0
        %2266 = vdwg.mxu0
        %v2268 = vsel %vm1621, %v1620, 0
        %2270 = vmatprep.subr.bf16.mxu0 0
        %2271 = vmatpush1.bf16.msra.mxu0 %v417
        %2272 = vmatprep.subr.bf16.mxu0 0
        %2273 = vmatpush1.bf16.msra.mxu0 0
        %2274 = vmatprep.subr.bf16.mxu0 0
        %2275 = vmatpush1.bf16.msra.mxu0 0
        %2276 = vmatprep.subr.bf16.mxu0 0
        %2277 = vmatpush1.bf16.msra.mxu0 0
        %2278 = vmatprep.subr.bf16.mxu0 0
        %2279 = vmatpush1.bf16.msra.mxu0 0
        %2280 = vmatprep.subr.bf16.mxu0 0
        %2281 = vmatpush1.bf16.msra.mxu0 0
        %2282 = vmatprep.subr.bf16.mxu0 0
        %2283 = vmatpush1.bf16.msra.mxu0 0
        %2284 = vmatprep.subr.bf16.mxu0 0
        %2285 = vmatpush1.bf16.msra.mxu0 0
        %2286 = vmatprep.subr.bf16.mxu0 0
        %2287 = vmatpush1.bf16.msra.mxu0 0
        %2288 = vmatprep.subr.bf16.mxu0 0
        %2289 = vmatpush1.bf16.msra.mxu0 0
        %2290 = vmatprep.subr.bf16.mxu0 0
        %2291 = vmatpush1.bf16.msra.mxu0 0
        %2292 = vmatprep.subr.bf16.mxu0 0
        %2293 = vmatpush1.bf16.msra.mxu0 0
        %2294 = vmatprep.subr.bf16.mxu0 0
        %2295 = vmatpush1.bf16.msra.mxu0 0
        %2296 = vmatprep.subr.bf16.mxu0 0
        %2297 = vmatpush1.bf16.msra.mxu0 0
        %2298 = vmatprep.subr.bf16.mxu0 0
        %2299 = vmatpush1.bf16.msra.mxu0 0
        %2300 = vmatprep.subr.bf16.mxu0 0
        %2301 = vmatpush1.bf16.msra.mxu0 0
        %2302 = vmatprep.mubr.bf16.mxu0 0
        %2303 = vmatmul.mubr.bf16.gmra.mrb[0].mxu0 %v2268
        %v2304 = vpop.f32.mrb[0].mxu0
        %v2305 = vadd.f32 0.0, %v2304
        %v2306 = vpop.f32.mrb[0].mxu0
        %v2307 = vpop.f32.mrb[0].mxu0
        %v2308 = vpop.f32.mrb[0].mxu0
        %2309 = vdwg.mxu0
        %v2310 = vld [vmem:[%s3] sm:$0x3]
        %v2311 = vmul.f32 %v1660, %v2310
        %v2312 = vmul.f32 %v1703, %v2310
        %v2313 = vmul.f32 %v1746, %v2310
        %v2314 = vmul.f32 %v1789, %v2310
        %v2315 = vmul.f32 %v1832, %v2310
        %v2316 = vmul.f32 %v1875, %v2310
        %v2317 = vmul.f32 %v1918, %v2310
        %v2318 = vmul.f32 %v1961, %v2310
        %v2319 = vmul.f32 %v2004, %v2310
        %v2320 = vmul.f32 %v2047, %v2310
        %v2321 = vmul.f32 %v2090, %v2310
        %v2322 = vmul.f32 %v2133, %v2310
        %v2323 = vmul.f32 %v2176, %v2310
        %v2324 = vmul.f32 %v2219, %v2310
        %v2325 = vmul.f32 %v2262, %v2310
        %v2326 = vmul.f32 %v2305, %v2310
        %vm2327 = vcmask 1041408
        %v2328 = vsel %vm2327, %v2311, 0.0
        %2329 = vadd.xlane.f32.xlu0 %v2328
        %v2330 = vpop.xlane.xlu0 %2329
        %v2331 = vsel %vm2327, %v2312, 0.0
        %2332 = vadd.xlane.f32.xlu0 %v2331
        %v2333 = vpop.xlane.xlu0 %2332
        %v2334 = vsel %vm2327, %v2313, 0.0
        %2335 = vadd.xlane.f32.xlu0 %v2334
        %v2336 = vpop.xlane.xlu0 %2335
        %v2337 = vsel %vm2327, %v2314, 0.0
        %2338 = vadd.xlane.f32.xlu0 %v2337
        %v2339 = vpop.xlane.xlu0 %2338
        %v2340 = vsel %vm2327, %v2315, 0.0
        %2341 = vadd.xlane.f32.xlu0 %v2340
        %v2342 = vpop.xlane.xlu0 %2341
        %v2343 = vsel %vm2327, %v2316, 0.0
        %2344 = vadd.xlane.f32.xlu0 %v2343
        %v2345 = vpop.xlane.xlu0 %2344
        %v2346 = vsel %vm2327, %v2317, 0.0
        %2347 = vadd.xlane.f32.xlu0 %v2346
        %v2348 = vpop.xlane.xlu0 %2347
        %v2349 = vsel %vm2327, %v2318, 0.0
        %2350 = vadd.xlane.f32.xlu0 %v2349
        %v2351 = vpop.xlane.xlu0 %2350
        %v2352 = vsel %vm2327, %v2319, 0.0
        %2353 = vadd.xlane.f32.xlu0 %v2352
        %v2354 = vpop.xlane.xlu0 %2353
        %v2355 = vsel %vm2327, %v2320, 0.0
        %2356 = vadd.xlane.f32.xlu0 %v2355
        %v2357 = vpop.xlane.xlu0 %2356
        %v2358 = vsel %vm2327, %v2321, 0.0
        %2359 = vadd.xlane.f32.xlu0 %v2358
        %v2360 = vpop.xlane.xlu0 %2359
        %v2361 = vsel %vm2327, %v2322, 0.0
        %2362 = vadd.xlane.f32.xlu0 %v2361
        %v2363 = vpop.xlane.xlu0 %2362
        %v2364 = vsel %vm2327, %v2323, 0.0
        %2365 = vadd.xlane.f32.xlu0 %v2364
        %v2366 = vpop.xlane.xlu0 %2365
        %v2367 = vsel %vm2327, %v2324, 0.0
        %2368 = vadd.xlane.f32.xlu0 %v2367
        %v2369 = vpop.xlane.xlu0 %2368
        %v2370 = vsel %vm2327, %v2325, 0.0
        %2371 = vadd.xlane.f32.xlu0 %v2370
        %v2372 = vpop.xlane.xlu0 %2371
        %v2373 = vsel %vm2327, %v2326, 0.0
        %2374 = vadd.xlane.f32.xlu0 %v2373
        %v2375 = vpop.xlane.xlu0 %2374
        %v2376 = vmul.f32 %v1660, %v1660
        %v2377 = vmul.f32 %v1703, %v1703
        %v2378 = vmul.f32 %v1746, %v1746
        %v2379 = vmul.f32 %v1789, %v1789
        %v2380 = vmul.f32 %v1832, %v1832
        %v2381 = vmul.f32 %v1875, %v1875
        %v2382 = vmul.f32 %v1918, %v1918
        %v2383 = vmul.f32 %v1961, %v1961
        %v2384 = vmul.f32 %v2004, %v2004
        %v2385 = vmul.f32 %v2047, %v2047
        %v2386 = vmul.f32 %v2090, %v2090
        %v2387 = vmul.f32 %v2133, %v2133
        %v2388 = vmul.f32 %v2176, %v2176
        %v2389 = vmul.f32 %v2219, %v2219
        %v2390 = vmul.f32 %v2262, %v2262
        %v2391 = vmul.f32 %v2305, %v2305
        %v2392 = vsel %vm2327, %v2376, 0.0
        %2393 = vadd.xlane.f32.xlu0 %v2392
        %v2394 = vpop.xlane.xlu0 %2393
        %v2395 = vsel %vm2327, %v2377, 0.0
        %2396 = vadd.xlane.f32.xlu0 %v2395
        %v2397 = vpop.xlane.xlu0 %2396
        %v2398 = vsel %vm2327, %v2378, 0.0
        %2399 = vadd.xlane.f32.xlu0 %v2398
        %v2400 = vpop.xlane.xlu0 %2399
        %v2401 = vsel %vm2327, %v2379, 0.0
        %2402 = vadd.xlane.f32.xlu0 %v2401
        %v2403 = vpop.xlane.xlu0 %2402
        %v2404 = vsel %vm2327, %v2380, 0.0
        %2405 = vadd.xlane.f32.xlu0 %v2404
        %v2406 = vpop.xlane.xlu0 %2405
        %v2407 = vsel %vm2327, %v2381, 0.0
        %2408 = vadd.xlane.f32.xlu0 %v2407
        %v2409 = vpop.xlane.xlu0 %2408
        %v2410 = vsel %vm2327, %v2382, 0.0
        %2411 = vadd.xlane.f32.xlu0 %v2410
        %v2412 = vpop.xlane.xlu0 %2411
        %v2413 = vsel %vm2327, %v2383, 0.0
        %2414 = vadd.xlane.f32.xlu0 %v2413
        %v2415 = vpop.xlane.xlu0 %2414
        %v2416 = vsel %vm2327, %v2384, 0.0
        %2417 = vadd.xlane.f32.xlu0 %v2416
        %v2418 = vpop.xlane.xlu0 %2417
        %v2419 = vsel %vm2327, %v2385, 0.0
        %2420 = vadd.xlane.f32.xlu0 %v2419
        %v2421 = vpop.xlane.xlu0 %2420
        %v2422 = vsel %vm2327, %v2386, 0.0
        %2423 = vadd.xlane.f32.xlu0 %v2422
        %v2424 = vpop.xlane.xlu0 %2423
        %v2425 = vsel %vm2327, %v2387, 0.0
        %2426 = vadd.xlane.f32.xlu0 %v2425
        %v2427 = vpop.xlane.xlu0 %2426
        %v2428 = vsel %vm2327, %v2388, 0.0
        %2429 = vadd.xlane.f32.xlu0 %v2428
        %v2430 = vpop.xlane.xlu0 %2429
        %v2431 = vsel %vm2327, %v2389, 0.0
        %2432 = vadd.xlane.f32.xlu0 %v2431
        %v2433 = vpop.xlane.xlu0 %2432
        %v2434 = vsel %vm2327, %v2390, 0.0
        %2435 = vadd.xlane.f32.xlu0 %v2434
        %v2436 = vpop.xlane.xlu0 %2435
        %v2437 = vsel %vm2327, %v2391, 0.0
        %2438 = vadd.xlane.f32.xlu0 %v2437
        %v2439 = vpop.xlane.xlu0 %2438
        %v2440 = vrsqrt.pop %v2394
        %v2441 = vmul.f32 %v2394, %v2440
        %vm2442 = vcmp.eq.f32.partialorder %v2394, inf
        %v2443 = vsel %vm2442, %v2394, %v2441
        %vm2444 = vcmp.eq.f32.partialorder %v2394, 0.0
        %v2445 = vand.u32 %v2394, 2147483648
        %v2446 = vsel %vm2444, %v2445, %v2443
        %v2447 = vrsqrt.pop %v2397
        %v2448 = vmul.f32 %v2397, %v2447
        %vm2449 = vcmp.eq.f32.partialorder %v2397, inf
        %v2450 = vsel %vm2449, %v2397, %v2448
        %vm2451 = vcmp.eq.f32.partialorder %v2397, 0.0
        %v2452 = vand.u32 %v2397, 2147483648
        %v2453 = vsel %vm2451, %v2452, %v2450
        %v2454 = vrsqrt.pop %v2400
        %v2455 = vmul.f32 %v2400, %v2454
        %vm2456 = vcmp.eq.f32.partialorder %v2400, inf
        %v2457 = vsel %vm2456, %v2400, %v2455
        %vm2458 = vcmp.eq.f32.partialorder %v2400, 0.0
        %v2459 = vand.u32 %v2400, 2147483648
        %v2460 = vsel %vm2458, %v2459, %v2457
        %v2461 = vrsqrt.pop %v2403
        %v2462 = vmul.f32 %v2403, %v2461
        %vm2463 = vcmp.eq.f32.partialorder %v2403, inf
        %v2464 = vsel %vm2463, %v2403, %v2462
        %vm2465 = vcmp.eq.f32.partialorder %v2403, 0.0
        %v2466 = vand.u32 %v2403, 2147483648
        %v2467 = vsel %vm2465, %v2466, %v2464
        %v2468 = vrsqrt.pop %v2406
        %v2469 = vmul.f32 %v2406, %v2468
        %vm2470 = vcmp.eq.f32.partialorder %v2406, inf
        %v2471 = vsel %vm2470, %v2406, %v2469
        %vm2472 = vcmp.eq.f32.partialorder %v2406, 0.0
        %v2473 = vand.u32 %v2406, 2147483648
        %v2474 = vsel %vm2472, %v2473, %v2471
        %v2475 = vrsqrt.pop %v2409
        %v2476 = vmul.f32 %v2409, %v2475
        %vm2477 = vcmp.eq.f32.partialorder %v2409, inf
        %v2478 = vsel %vm2477, %v2409, %v2476
        %vm2479 = vcmp.eq.f32.partialorder %v2409, 0.0
        %v2480 = vand.u32 %v2409, 2147483648
        %v2481 = vsel %vm2479, %v2480, %v2478
        %v2482 = vrsqrt.pop %v2412
        %v2483 = vmul.f32 %v2412, %v2482
        %vm2484 = vcmp.eq.f32.partialorder %v2412, inf
        %v2485 = vsel %vm2484, %v2412, %v2483
        %vm2486 = vcmp.eq.f32.partialorder %v2412, 0.0
        %v2487 = vand.u32 %v2412, 2147483648
        %v2488 = vsel %vm2486, %v2487, %v2485
        %v2489 = vrsqrt.pop %v2415
        %v2490 = vmul.f32 %v2415, %v2489
        %vm2491 = vcmp.eq.f32.partialorder %v2415, inf
        %v2492 = vsel %vm2491, %v2415, %v2490
        %vm2493 = vcmp.eq.f32.partialorder %v2415, 0.0
        %v2494 = vand.u32 %v2415, 2147483648
        %v2495 = vsel %vm2493, %v2494, %v2492
        %v2496 = vrsqrt.pop %v2418
        %v2497 = vmul.f32 %v2418, %v2496
        %vm2498 = vcmp.eq.f32.partialorder %v2418, inf
        %v2499 = vsel %vm2498, %v2418, %v2497
        %vm2500 = vcmp.eq.f32.partialorder %v2418, 0.0
        %v2501 = vand.u32 %v2418, 2147483648
        %v2502 = vsel %vm2500, %v2501, %v2499
        %v2503 = vrsqrt.pop %v2421
        %v2504 = vmul.f32 %v2421, %v2503
        %vm2505 = vcmp.eq.f32.partialorder %v2421, inf
        %v2506 = vsel %vm2505, %v2421, %v2504
        %vm2507 = vcmp.eq.f32.partialorder %v2421, 0.0
        %v2508 = vand.u32 %v2421, 2147483648
        %v2509 = vsel %vm2507, %v2508, %v2506
        %v2510 = vrsqrt.pop %v2424
        %v2511 = vmul.f32 %v2424, %v2510
        %vm2512 = vcmp.eq.f32.partialorder %v2424, inf
        %v2513 = vsel %vm2512, %v2424, %v2511
        %vm2514 = vcmp.eq.f32.partialorder %v2424, 0.0
        %v2515 = vand.u32 %v2424, 2147483648
        %v2516 = vsel %vm2514, %v2515, %v2513
        %v2517 = vrsqrt.pop %v2427
        %v2518 = vmul.f32 %v2427, %v2517
        %vm2519 = vcmp.eq.f32.partialorder %v2427, inf
        %v2520 = vsel %vm2519, %v2427, %v2518
        %vm2521 = vcmp.eq.f32.partialorder %v2427, 0.0
        %v2522 = vand.u32 %v2427, 2147483648
        %v2523 = vsel %vm2521, %v2522, %v2520
        %v2524 = vrsqrt.pop %v2430
        %v2525 = vmul.f32 %v2430, %v2524
        %vm2526 = vcmp.eq.f32.partialorder %v2430, inf
        %v2527 = vsel %vm2526, %v2430, %v2525
        %vm2528 = vcmp.eq.f32.partialorder %v2430, 0.0
        %v2529 = vand.u32 %v2430, 2147483648
        %v2530 = vsel %vm2528, %v2529, %v2527
        %v2531 = vrsqrt.pop %v2433
        %v2532 = vmul.f32 %v2433, %v2531
        %vm2533 = vcmp.eq.f32.partialorder %v2433, inf
        %v2534 = vsel %vm2533, %v2433, %v2532
        %vm2535 = vcmp.eq.f32.partialorder %v2433, 0.0
        %v2536 = vand.u32 %v2433, 2147483648
        %v2537 = vsel %vm2535, %v2536, %v2534
        %v2538 = vrsqrt.pop %v2436
        %v2539 = vmul.f32 %v2436, %v2538
        %vm2540 = vcmp.eq.f32.partialorder %v2436, inf
        %v2541 = vsel %vm2540, %v2436, %v2539
        %vm2542 = vcmp.eq.f32.partialorder %v2436, 0.0
        %v2543 = vand.u32 %v2436, 2147483648
        %v2544 = vsel %vm2542, %v2543, %v2541
        %v2545 = vrsqrt.pop %v2439
        %v2546 = vmul.f32 %v2439, %v2545
        %vm2547 = vcmp.eq.f32.partialorder %v2439, inf
        %v2548 = vsel %vm2547, %v2439, %v2546
        %vm2549 = vcmp.eq.f32.partialorder %v2439, 0.0
        %v2550 = vand.u32 %v2439, 2147483648
        %v2551 = vsel %vm2549, %v2550, %v2548
        %v2552 = vld [vmem:[%s4] sm:$0x1]
        %v2554 = vlaneseq
        %v2555 = vshrl.u32 %v2554, 7
        %v2556 = vsub.s32 0, %v2555
        %v2557 = vrot.slane %v2552, %v2556
        %2559 = vbcast.lane.b32.xlu0 %v2557, 256
        %v2560 = vpop.permute.xlu0 %2559
        %v2562 = vmul.f32 %v2446, %v2560
        %v2563 = vmul.f32 %v2453, %v2560
        %v2564 = vmul.f32 %v2460, %v2560
        %v2565 = vmul.f32 %v2467, %v2560
        %v2566 = vmul.f32 %v2474, %v2560
        %v2567 = vmul.f32 %v2481, %v2560
        %v2568 = vmul.f32 %v2488, %v2560
        %v2569 = vmul.f32 %v2495, %v2560
        %v2570 = vmul.f32 %v2502, %v2560
        %v2571 = vmul.f32 %v2509, %v2560
        %v2572 = vmul.f32 %v2516, %v2560
        %v2573 = vmul.f32 %v2523, %v2560
        %v2574 = vmul.f32 %v2530, %v2560
        %v2575 = vmul.f32 %v2537, %v2560
        %v2576 = vmul.f32 %v2544, %v2560
        %v2577 = vmul.f32 %v2551, %v2560
        %v2578 = vmax.f32 %v2562, 1e-08
        %v2579 = vmax.f32 %v2563, 1e-08
        %v2580 = vmax.f32 %v2564, 1e-08
        %v2581 = vmax.f32 %v2565, 1e-08
        %v2582 = vmax.f32 %v2566, 1e-08
        %v2583 = vmax.f32 %v2567, 1e-08
        %v2584 = vmax.f32 %v2568, 1e-08
        %v2585 = vmax.f32 %v2569, 1e-08
        %v2586 = vmax.f32 %v2570, 1e-08
        %v2587 = vmax.f32 %v2571, 1e-08
        %v2588 = vmax.f32 %v2572, 1e-08
        %v2589 = vmax.f32 %v2573, 1e-08
        %v2590 = vmax.f32 %v2574, 1e-08
        %v2591 = vmax.f32 %v2575, 1e-08
        %v2592 = vmax.f32 %v2576, 1e-08
        %v2593 = vmax.f32 %v2577, 1e-08
        %v2594 = vrcp.pop %v2578
        %v2595 = vrcp.pop %v2579
        %v2596 = vrcp.pop %v2580
        %v2597 = vrcp.pop %v2581
        %v2598 = vrcp.pop %v2582
        %v2599 = vrcp.pop %v2583
        %v2600 = vrcp.pop %v2584
        %v2601 = vrcp.pop %v2585
        %v2602 = vrcp.pop %v2586
        %v2603 = vrcp.pop %v2587
        %v2604 = vrcp.pop %v2588
        %v2605 = vrcp.pop %v2589
        %v2606 = vrcp.pop %v2590
        %v2607 = vrcp.pop %v2591
        %v2608 = vrcp.pop %v2592
        %v2609 = vrcp.pop %v2593
        %v2610 = vmul.f32 %v2330, %v2594
        %v2611 = vmul.f32 %v2333, %v2595
        %v2612 = vmul.f32 %v2336, %v2596
        %v2613 = vmul.f32 %v2339, %v2597
        %v2614 = vmul.f32 %v2342, %v2598
        %v2615 = vmul.f32 %v2345, %v2599
        %v2616 = vmul.f32 %v2348, %v2600
        %v2617 = vmul.f32 %v2351, %v2601
        %v2618 = vmul.f32 %v2354, %v2602
        %v2619 = vmul.f32 %v2357, %v2603
        %v2620 = vmul.f32 %v2360, %v2604
        %v2621 = vmul.f32 %v2363, %v2605
        %v2622 = vmul.f32 %v2366, %v2606
        %v2623 = vmul.f32 %v2369, %v2607
        %v2624 = vmul.f32 %v2372, %v2608
        %v2625 = vmul.f32 %v2375, %v2609
        %v2626 = vsub.f32 1.0, %v2610
        %v2627 = vsub.f32 1.0, %v2611
        %v2628 = vsub.f32 1.0, %v2612
        %v2629 = vsub.f32 1.0, %v2613
        %v2630 = vsub.f32 1.0, %v2614
        %v2631 = vsub.f32 1.0, %v2615
        %v2632 = vsub.f32 1.0, %v2616
        %v2633 = vsub.f32 1.0, %v2617
        %v2634 = vsub.f32 1.0, %v2618
        %v2635 = vsub.f32 1.0, %v2619
        %v2636 = vsub.f32 1.0, %v2620
        %v2637 = vsub.f32 1.0, %v2621
        %v2638 = vsub.f32 1.0, %v2622
        %v2639 = vsub.f32 1.0, %v2623
        %v2640 = vsub.f32 1.0, %v2624
        %v2641 = vsub.f32 1.0, %v2625
        %v2642 = vmul.f32 %v2626, 0.5
        %v2643 = vmul.f32 %v2627, 0.5
        %v2644 = vmul.f32 %v2628, 0.5
        %v2645 = vmul.f32 %v2629, 0.5
        %v2646 = vmul.f32 %v2630, 0.5
        %v2647 = vmul.f32 %v2631, 0.5
        %v2648 = vmul.f32 %v2632, 0.5
        %v2649 = vmul.f32 %v2633, 0.5
        %v2650 = vmul.f32 %v2634, 0.5
        %v2651 = vmul.f32 %v2635, 0.5
        %v2652 = vmul.f32 %v2636, 0.5
        %v2653 = vmul.f32 %v2637, 0.5
        %v2654 = vmul.f32 %v2638, 0.5
        %v2655 = vmul.f32 %v2639, 0.5
        %v2656 = vmul.f32 %v2640, 0.5
        %v2657 = vmul.f32 %v2641, 0.5
        %2674 = vset.pattern.permute.xlu0 0
        %2675 = vperm.xlu0 %2674, %v2642
        %v2676 = vpop.permute.xlu0 %2675
        %2677 = vset.pattern.permute.xlu0 0
        %2678 = vperm.xlu0 %2677, %v2643
        %v2679 = vpop.permute.xlu0 %2678
        %2680 = vset.pattern.permute.xlu0 0
        %2681 = vperm.xlu0 %2680, %v2644
        %v2682 = vpop.permute.xlu0 %2681
        %2683 = vset.pattern.permute.xlu0 0
        %2684 = vperm.xlu0 %2683, %v2645
        %v2685 = vpop.permute.xlu0 %2684
        %2686 = vset.pattern.permute.xlu0 0
        %2687 = vperm.xlu0 %2686, %v2646
        %v2688 = vpop.permute.xlu0 %2687
        %2689 = vset.pattern.permute.xlu0 0
        %2690 = vperm.xlu0 %2689, %v2647
        %v2691 = vpop.permute.xlu0 %2690
        %2692 = vset.pattern.permute.xlu0 0
        %2693 = vperm.xlu0 %2692, %v2648
        %v2694 = vpop.permute.xlu0 %2693
        %2695 = vset.pattern.permute.xlu0 0
        %2696 = vperm.xlu0 %2695, %v2649
        %v2697 = vpop.permute.xlu0 %2696
        %2698 = vset.pattern.permute.xlu0 0
        %2699 = vperm.xlu0 %2698, %v2650
        %v2700 = vpop.permute.xlu0 %2699
        %2701 = vset.pattern.permute.xlu0 0
        %2702 = vperm.xlu0 %2701, %v2651
        %v2703 = vpop.permute.xlu0 %2702
        %2704 = vset.pattern.permute.xlu0 0
        %2705 = vperm.xlu0 %2704, %v2652
        %v2706 = vpop.permute.xlu0 %2705
        %2707 = vset.pattern.permute.xlu0 0
        %2708 = vperm.xlu0 %2707, %v2653
        %v2709 = vpop.permute.xlu0 %2708
        %2710 = vset.pattern.permute.xlu0 0
        %2711 = vperm.xlu0 %2710, %v2654
        %v2712 = vpop.permute.xlu0 %2711
        %2713 = vset.pattern.permute.xlu0 0
        %2714 = vperm.xlu0 %2713, %v2655
        %v2715 = vpop.permute.xlu0 %2714
        %2716 = vset.pattern.permute.xlu0 0
        %2717 = vperm.xlu0 %2716, %v2656
        %v2718 = vpop.permute.xlu0 %2717
        %2719 = vset.pattern.permute.xlu0 0
        %2720 = vperm.xlu0 %2719, %v2657
        %v2721 = vpop.permute.xlu0 %2720
        %v2722 = vlaneseq
        %v2723 = vand.u32 %v2722, 127
        %v2724 = vlaneseq
        %v2725 = vshrl.u32 %v2724, 7
        %v2726 = vsub.s32 %v2723, %v2725
        %v2727 = vrot.slane %v2676, %v2726
        %v2728 = vlaneseq
        %v2729 = vshrl.u32 %v2728, 7
        %v2730 = vsub.s32 %v2723, %v2729
        %v2731 = vrot.slane %v2679, %v2730
        %v2732 = vlaneseq
        %v2733 = vshrl.u32 %v2732, 7
        %v2734 = vsub.s32 %v2723, %v2733
        %v2735 = vrot.slane %v2682, %v2734
        %v2736 = vlaneseq
        %v2737 = vshrl.u32 %v2736, 7
        %v2738 = vsub.s32 %v2723, %v2737
        %v2739 = vrot.slane %v2685, %v2738
        %v2740 = vlaneseq
        %v2741 = vshrl.u32 %v2740, 7
        %v2742 = vsub.s32 %v2723, %v2741
        %v2743 = vrot.slane %v2688, %v2742
        %v2744 = vlaneseq
        %v2745 = vshrl.u32 %v2744, 7
        %v2746 = vsub.s32 %v2723, %v2745
        %v2747 = vrot.slane %v2691, %v2746
        %v2748 = vlaneseq
        %v2749 = vshrl.u32 %v2748, 7
        %v2750 = vsub.s32 %v2723, %v2749
        %v2751 = vrot.slane %v2694, %v2750
        %v2752 = vlaneseq
        %v2753 = vshrl.u32 %v2752, 7
        %v2754 = vsub.s32 %v2723, %v2753
        %v2755 = vrot.slane %v2697, %v2754
        %v2756 = vlaneseq
        %v2757 = vshrl.u32 %v2756, 7
        %v2758 = vsub.s32 %v2723, %v2757
        %v2759 = vrot.slane %v2700, %v2758
        %v2760 = vlaneseq
        %v2761 = vshrl.u32 %v2760, 7
        %v2762 = vsub.s32 %v2723, %v2761
        %v2763 = vrot.slane %v2703, %v2762
        %v2764 = vlaneseq
        %v2765 = vshrl.u32 %v2764, 7
        %v2766 = vsub.s32 %v2723, %v2765
        %v2767 = vrot.slane %v2706, %v2766
        %v2768 = vlaneseq
        %v2769 = vshrl.u32 %v2768, 7
        %v2770 = vsub.s32 %v2723, %v2769
        %v2771 = vrot.slane %v2709, %v2770
        %v2772 = vlaneseq
        %v2773 = vshrl.u32 %v2772, 7
        %v2774 = vsub.s32 %v2723, %v2773
        %v2775 = vrot.slane %v2712, %v2774
        %v2776 = vlaneseq
        %v2777 = vshrl.u32 %v2776, 7
        %v2778 = vsub.s32 %v2723, %v2777
        %v2779 = vrot.slane %v2715, %v2778
        %v2780 = vlaneseq
        %v2781 = vshrl.u32 %v2780, 7
        %v2782 = vsub.s32 %v2723, %v2781
        %v2783 = vrot.slane %v2718, %v2782
        %v2784 = vlaneseq
        %v2785 = vshrl.u32 %v2784, 7
        %v2786 = vsub.s32 %v2723, %v2785
        %v2787 = vrot.slane %v2721, %v2786
        %vm2788 = vcmask 1041409
        %v2789 = vsel %vm2788, %v2731, %v2727
        %vm2790 = vcmask 1042434
        %v2791 = vsel %vm2790, %v2735, %v2789
        %vm2792 = vcmask 1043459
        %v2793 = vsel %vm2792, %v2739, %v2791
        %vm2794 = vcmask 1044484
        %v2795 = vsel %vm2794, %v2743, %v2793
        %vm2796 = vcmask 1045509
        %v2797 = vsel %vm2796, %v2747, %v2795
        %vm2798 = vcmask 1046534
        %v2799 = vsel %vm2798, %v2751, %v2797
        %vm2800 = vcmask 1047559
        %v2801 = vsel %vm2800, %v2755, %v2799
        %v2802 = vsel %vm2788, %v2763, %v2759
        %v2803 = vsel %vm2790, %v2767, %v2802
        %v2804 = vsel %vm2792, %v2771, %v2803
        %v2805 = vsel %vm2794, %v2775, %v2804
        %v2806 = vsel %vm2796, %v2779, %v2805
        %v2807 = vsel %vm2798, %v2783, %v2806
        %v2808 = vsel %vm2800, %v2787, %v2807
        %vm2811 = vcmask 15360
        %2812 = vst.msk [vmem:[%s281] sm:$0xff] %vm2811, %v2801
        %2813 = vst.msk [vmem:[%s281 + $0x8] sm:$0xff] %vm2811, %v2808
        %s2814 = smul.u32 2, %s21
        %p2815 = scmp.lt.s32.totalorder %s2814, 3
        %s2816 = scalar_select %p2815, %s2814, 3
        %s2817 = smul.addr %s2816, 8
        %s2818 = scalar_lea.vmem %s5, %s2817
        %s2819 = smul.u32 16, %s21
        %p2820 = scmp.lt.s32.totalorder %s2819, 31
        %s2821 = scalar_select %p2820, %s2819, 31
        %s2822 = smul.addr %s2821, 2
        %s2823 = scalar_lea.vmem %s6, %s2822
        // Predicated region
        $region45: #{tpu_custom_call.1} parent=39 // pred_check
          %p2824 = pneg %p149
        $region46: #{tpu_custom_call.1} parent=39 // pred_check_branch
          %2826 = sbr.rel (%p2824) target = $region48
        $region47: #{tpu_custom_call.1} parent=39 // pred_region
          %s2827 = smul.u32 2, %s21
        $region48: #{tpu_custom_call.1} parent=39 // pred_fallthru
          _
        // Predicated region
        $region49: #{tpu_custom_call.1} parent=39 // pred_check
          %p2828 = pneg %p175
        $region50: #{tpu_custom_call.1} parent=39 // pred_check_branch
          %2830 = sbr.rel (%p2828) target = $region52
        $region51: #{tpu_custom_call.1} parent=39 // pred_region
          %s2831 = smul.u32 16, %s21
        $region52: #{tpu_custom_call.1} parent=39 // pred_fallthru
          _
      $region40: #{tpu_custom_call.1} parent=5 // pred_fallthru
        _
      %p2832 = scmp.le.s32.totalorder 2, %s16
      // Predicated region
      $region53: #{tpu_custom_call.1} parent=5 // pred_check
        %p2833 = pneg %p2832
      $region54: #{tpu_custom_call.1} parent=5 // pred_check_branch
        %2835 = sbr.rel (%p2833) target = $region56
      $region55: #{tpu_custom_call.1} parent=5 // pred_region
        %s2836 = ssub.s32 %s16, 2
        // Predicated region
        $region57: #{tpu_custom_call.1} parent=55 // pred_check
          %p2837 = pneg %p155
        $region58: #{tpu_custom_call.1} parent=55 // pred_check_branch
          %2839 = sbr.rel (%p2837) target = $region60
        $region59: #{tpu_custom_call.1} parent=55 // pred_region
          %s2840 = smul.u32 2, %s22
          %p2841 = scmp.lt.s32.totalorder %s2840, 3
          %s2842 = scalar_select %p2841, %s2840, 3
          %s2843 = smul.addr %s2842, 8
          %s2844 = scalar_lea.vmem %s5, %s2843
        $region60: #{tpu_custom_call.1} parent=55 // pred_fallthru
          _
        // Predicated region
        $region61: #{tpu_custom_call.1} parent=55 // pred_check
          %p2845 = pneg %p181
        $region62: #{tpu_custom_call.1} parent=55 // pred_check_branch
          %2847 = sbr.rel (%p2845) target = $region64
        $region63: #{tpu_custom_call.1} parent=55 // pred_region
          %s2848 = smul.u32 16, %s22
          %p2849 = scmp.lt.s32.totalorder %s2848, 31
          %s2850 = scalar_select %p2849, %s2848, 31
          %s2851 = smul.addr %s2850, 2
          %s2852 = scalar_lea.vmem %s6, %s2851
        $region64: #{tpu_custom_call.1} parent=55 // pred_fallthru
          _
      $region56: #{tpu_custom_call.1} parent=5 // pred_fallthru
        _
    $region6: #{tpu_custom_call.1} parent=1 // loop_footer
      %s20 = sadd.s32 1, %s16
    $region7: #{tpu_custom_call.1} parent=1 // loop_footer_branch
      %15 = sbr.rel target = $region3
    $region8: #{tpu_custom_call.1} parent=1 // loop_exit
      _
    %2853 = vsyncpa [#allocation3], 1
    %s2854 = scalar_lea.sflag [#allocation3], 1
    %2855 = vsyncpa %s2854, 1

</llo_original>
